<compile_context>
chip_gen: v7x
topology: tpu7x:2x2x1
jax: 0.10.0
libtpu: 0.0.40
codegen_flags: <defaults>
</compile_context>

<pallas_src>
import jax
import jax.numpy as jnp
from jax import lax
from jax.experimental import pallas as pl
from jax.experimental.pallas import tpu as pltpu

N_EMBD = 384        # matches the module's n_embd
HEAD_SIZE = 64      # head_size passed to Head(...)
BLOCK_SIZE = 256    # matches the module's registered tril buffer (max T)

_VMEM_LIMIT = 32 * 1024 * 1024  # explicit, safe on v5e/v6e/v7x


# ---------------------- fused QKV-projection + attention ---------------------

def fused_head_kernel(x_ref, w_ref, o_ref):
    """One batch element per grid step.

    x_ref: (T, C) f32   -- one batch slice of the input
    w_ref: (C, 3H) bf16 -- fused weight [W_q*scale | W_k | W_v] (grid-resident)
    o_ref: (T, H) f32   -- attention output for this batch element
    """
    t = x_ref.shape[0]
    h = o_ref.shape[-1]

    # ---- fused QKV projection: one MXU pass over the full (C, 3H) weight ----
    x = x_ref[...].astype(jnp.bfloat16)            # cast in-kernel, hidden under MXU
    qkv = jnp.dot(x, w_ref[...], preferred_element_type=jnp.float32)  # (T, 3H) f32
    q = qkv[:, 0:h].astype(jnp.bfloat16)           # q already carries 1/sqrt(H)
    k = qkv[:, h:2 * h].astype(jnp.bfloat16)
    v = qkv[:, 2 * h:3 * h].astype(jnp.bfloat16)

    # ---- scores: q @ k^T, contracting on H (no explicit transpose / XLU) ----
    s = lax.dot_general(q, k, dimension_numbers=(((1,), (1,)), ((), ())),
                        preferred_element_type=jnp.float32)           # (T, T) f32

    # ---- causal mask (whole-T tile == the diagonal tile) ----
    row = lax.broadcasted_iota(jnp.int32, (t, t), 0)
    col = lax.broadcasted_iota(jnp.int32, (t, t), 1)
    s = jnp.where(row >= col, s, -jnp.inf)

    # ---- single-tile stable softmax: no online rescale needed ----
    m = jnp.max(s, axis=-1, keepdims=True)
    p = jnp.exp(s - m)                              # masked lanes -> exp(-inf) = 0
    l = jnp.sum(p, axis=-1, keepdims=True)

    # ---- p @ v with f32 accumulation, normalize once per batch element ----
    o = jnp.dot(p.astype(jnp.bfloat16), v, preferred_element_type=jnp.float32)
    o_ref[...] = o * pl.reciprocal(l, approx=False)


# --------------------------------- wrappers ----------------------------------

def make_head_params(w_key, w_query, w_value):
    """Pre-fuse the projection weights (call ONCE at parameter load, not per
    forward): fold the 1/sqrt(head_size) softmax scale into W_q (power of two,
    exact in bf16) and pack [W_q*scale | W_k | W_v] into one (C, 3H) bf16."""
    h = w_key.shape[1]
    scale = h ** -0.5
    return jnp.concatenate(
        [w_query * scale, w_key, w_value], axis=1).astype(jnp.bfloat16)


@jax.jit
def head_forward(x, w_qkv):
    """x: (B, T, C) f32; w_qkv: (C, 3H) bf16 from make_head_params.
    Returns the causal single-head attention output (B, T, H) f32."""
    B, T, C = x.shape
    H = w_qkv.shape[1] // 3

    flops = B * (2 * T * C * 3 * H + 4 * T * T * H)        # proj + qk^T + pv
    transcendentals = B * T * T
    bytes_accessed = B * T * C * 4 + C * 3 * H * 2 + B * T * H * 4

    return pl.pallas_call(
        fused_head_kernel,
        out_shape=jax.ShapeDtypeStruct((B, T, H), jnp.float32),
        grid_spec=pltpu.PrefetchScalarGridSpec(
            num_scalar_prefetch=0,
            grid=(B,),
            in_specs=[
                pl.BlockSpec((None, T, C), lambda b: (b, 0, 0)),   # one batch of x
                pl.BlockSpec((C, 3 * H), lambda b: (0, 0)),        # resident weight
            ],
            out_specs=pl.BlockSpec((None, T, H), lambda b: (b, 0, 0)),
        ),
        compiler_params=pltpu.CompilerParams(
            dimension_semantics=("parallel",),     # B>=2 keeps both v7x TCs busy
            vmem_limit_bytes=_VMEM_LIMIT),
        cost_estimate=pl.CostEstimate(
            flops=flops, transcendentals=transcendentals,
            bytes_accessed=bytes_accessed),
    )(x, w_qkv)


def head_reference(x, w_key, w_query, w_value):
    """Pure-JAX f32 reference reproducing the PyTorch forward (eval mode)."""
    k = x @ w_key
    q = x @ w_query
    v = x @ w_value
    wei = (q @ jnp.swapaxes(k, -2, -1)) * (k.shape[-1] ** -0.5)
    T = x.shape[1]
    tril = jnp.tril(jnp.ones((T, T), dtype=bool))
    wei = jnp.where(tril, wei, -jnp.inf)
    wei = jax.nn.softmax(wei, axis=-1)
    return wei @ v


if __name__ == "__main__":
    B, T, C, H = 2, BLOCK_SIZE, N_EMBD, HEAD_SIZE   # T = block_size = 256
    assert T <= BLOCK_SIZE

    key = jax.random.PRNGKey(0)
    kx, kk, kq, kv = jax.random.split(key, 4)

    x = jax.random.normal(kx, (B, T, C), dtype=jnp.float32)
    bound = 1.0 / (C ** 0.5)
    w_key = jax.random.uniform(kk, (C, H), jnp.float32, -bound, bound)
    w_query = jax.random.uniform(kq, (C, H), jnp.float32, -bound, bound)
    w_value = jax.random.uniform(kv, (C, H), jnp.float32, -bound, bound)

    w_qkv = make_head_params(w_key, w_query, w_value)   # once, at "param load"
    out = head_forward(x, w_qkv)
    out = jax.block_until_ready(out)

    ref = head_reference(x, w_key, w_query, w_value)
    assert out.shape == (B, T, H)
    max_err = float(jnp.max(jnp.abs(out - ref)))
    # bf16 MXU inputs => relaxed tolerance vs the f32 reference.
    assert jnp.allclose(out, ref, atol=2e-2, rtol=2e-2), \
        f"mismatch vs reference, max abs err={max_err}"

    print("KERNEL_OK")
</pallas_src>

<mosaic_0001>
module attributes {stable_mosaic.version = 11 : i64} {
  func.func @fused_head_kernel(%arg0: i32, %arg1: memref<1x256x384xf32, #tpu.memory_space<vmem>>, %arg2: memref<384x192xbf16, #tpu.memory_space<vmem>>, %arg3: memref<1x256x64xf32, #tpu.memory_space<vmem>>) attributes {dimension_semantics = [#tpu.dimension_semantics<parallel>], iteration_bounds = array<i64: 2>, scalar_prefetch = 0 : i64, scratch_operands = 0 : i64, tpu.core_type = #tpu.core_type<tc>, window_params = [{transform_indices = @transform_0, window_bounds = array<i64: 1, 256, 384>}, {pipeline_mode = #tpu.pipeline_mode<synchronous>, transform_indices = @transform_1, window_bounds = array<i64: 384, 192>}, {transform_indices = @transform_2, window_bounds = array<i64: 1, 256, 64>}]} {
    %c0 = arith.constant 0 : index
    %c0_0 = arith.constant 0 : index
    %c0_1 = arith.constant 0 : index
    %0 = vector.load %arg1[%c0, %c0_0, %c0_1] : memref<1x256x384xf32, #tpu.memory_space<vmem>>, vector<1x256x384xf32>
    %1 = vector.shape_cast %0 : vector<1x256x384xf32> to vector<256x384xf32>
    %2 = arith.truncf %1 : vector<256x384xf32> to vector<256x384xbf16>
    %c0_2 = arith.constant 0 : index
    %c0_3 = arith.constant 0 : index
    %3 = vector.load %arg2[%c0_2, %c0_3] : memref<384x192xbf16, #tpu.memory_space<vmem>>, vector<384x192xbf16>
    %cst = arith.constant dense<0.000000e+00> : vector<256x192xf32>
    %4 = tpu.matmul %2, %3, %cst {dimension_numbers = #tpu.dot_dimension_numbers<[1], [0], [0], [1], [0, 0, 1, 1], [], []>} : vector<256x384xbf16>, vector<384x192xbf16>, vector<256x192xf32> -> vector<256x192xf32>
    %5 = vector.extract_strided_slice %4 {offsets = [0, 0], sizes = [256, 64], strides = [1, 1]} : vector<256x192xf32> to vector<256x64xf32>
    %6 = arith.truncf %5 : vector<256x64xf32> to vector<256x64xbf16>
    %7 = vector.extract_strided_slice %4 {offsets = [0, 64], sizes = [256, 64], strides = [1, 1]} : vector<256x192xf32> to vector<256x64xf32>
    %8 = arith.truncf %7 : vector<256x64xf32> to vector<256x64xbf16>
    %9 = vector.extract_strided_slice %4 {offsets = [0, 128], sizes = [256, 64], strides = [1, 1]} : vector<256x192xf32> to vector<256x64xf32>
    %10 = arith.truncf %9 : vector<256x64xf32> to vector<256x64xbf16>
    %cst_4 = arith.constant dense<0.000000e+00> : vector<256x256xf32>
    %11 = tpu.matmul %6, %8, %cst_4 {dimension_numbers = #tpu.dot_dimension_numbers<[1], [1], [0], [0], [0, 0, 1, 0], [], []>} : vector<256x64xbf16>, vector<256x64xbf16>, vector<256x256xf32> -> vector<256x256xf32>
    %12 = tpu.iota {dimensions = array<i32: 0>} : vector<256x256xi32>
    %13 = tpu.iota {dimensions = array<i32: 1>} : vector<256x256xi32>
    %14 = arith.cmpi sge, %12, %13 : vector<256x256xi32>
    %cst_5 = arith.constant 0xFF800000 : f32
    %15 = vector.broadcast %cst_5 : f32 to vector<256x256xf32>
    %16 = arith.select %14, %11, %15 : vector<256x256xi1>, vector<256x256xf32>
    %cst_6 = arith.constant dense<0xFF800000> : vector<256xf32>
    %17 = vector.multi_reduction <maximumf>, %16, %cst_6 [1] : vector<256x256xf32> to vector<256xf32>
    %18 = vector.shape_cast %17 : vector<256xf32> to vector<256x1xf32>
    %19 = vector.broadcast %18 : vector<256x1xf32> to vector<256x256xf32>
    %20 = arith.subf %16, %19 : vector<256x256xf32>
    %21 = math.exp %20 : vector<256x256xf32>
    %cst_7 = arith.constant dense<0.000000e+00> : vector<256xf32>
    %22 = vector.multi_reduction <add>, %21, %cst_7 [1] : vector<256x256xf32> to vector<256xf32>
    %23 = vector.shape_cast %22 : vector<256xf32> to vector<256x1xf32>
    %24 = arith.truncf %21 : vector<256x256xf32> to vector<256x256xbf16>
    %cst_8 = arith.constant dense<0.000000e+00> : vector<256x64xf32>
    %25 = tpu.matmul %24, %10, %cst_8 {dimension_numbers = #tpu.dot_dimension_numbers<[1], [0], [0], [1], [0, 0, 1, 1], [], []>} : vector<256x256xbf16>, vector<256x64xbf16>, vector<256x64xf32> -> vector<256x64xf32>
    %26 = tpu.reciprocal %23 : vector<256x1xf32> -> vector<256x1xf32>
    %27 = vector.broadcast %26 : vector<256x1xf32> to vector<256x64xf32>
    %28 = arith.mulf %25, %27 : vector<256x64xf32>
    %c0_9 = arith.constant 0 : index
    %c0_10 = arith.constant 0 : index
    %c0_11 = arith.constant 0 : index
    %29 = vector.load %arg3[%c0_9, %c0_10, %c0_11] : memref<1x256x64xf32, #tpu.memory_space<vmem>>, vector<1x256x64xf32>
    %30 = vector.shape_cast %29 : vector<1x256x64xf32> to vector<256x64xf32>
    %31 = vector.shape_cast %28 : vector<256x64xf32> to vector<1x256x64xf32>
    tpu.vector_store %arg3[%c0_9, %c0_10, %c0_11], %31 {strides = array<i32>} : memref<1x256x64xf32, #tpu.memory_space<vmem>>, vector<1x256x64xf32>,
    return
  }
  func.func @transform_0(%arg0: i32) -> (i32, i32, i32) {
    %c0_i32 = arith.constant 0 : i32
    %c0_i32_0 = arith.constant 0 : i32
    %c0_i32_1 = arith.constant 0 : i32
    return %arg0, %c0_i32, %c0_i32_0 : i32, i32, i32
  }
  func.func @transform_1(%arg0: i32) -> (i32, i32) {
    %c0_i32 = arith.constant 0 : i32
    %c0_i32_0 = arith.constant 0 : i32
    %c0_i32_1 = arith.constant 0 : i32
    return %c0_i32, %c0_i32_0 : i32, i32
  }
  func.func @transform_2(%arg0: i32) -> (i32, i32, i32) {
    %c0_i32 = arith.constant 0 : i32
    %c0_i32_0 = arith.constant 0 : i32
    %c0_i32_1 = arith.constant 0 : i32
    return %arg0, %c0_i32, %c0_i32_0 : i32, i32, i32
  }
}

</mosaic_0001>

<llo_original>
// kernel: head_forward.1
$region0: #{head_forward.1}
  #allocation0 [shape = 'u32[]', space=smem, size = 0x4, offset = 0x4, fixed_abs, tag = 'smem constant byte address 0x4 - core index']
  #allocation1 [shape = 'u32[144,128]{1,0:T(1,128)}', space=vmem, size = 0x12000, scoped, tag = 'internal scratch']
  %s0 = inlined_call_operand.hbm [shape: f32[2,256,384], index: 0, kind: input, shape index: {}]
  %s1 = inlined_call_operand.vmem [shape: bf16[384,192], index: 1, kind: input, shape index: {}]
  %s2 = inlined_call_operand.vmem [shape: f32[2,256,64], index: 2, kind: output, shape index: {}]
  %s3 = sld [smem:[#allocation0]]
  $region45: #{head_forward.1} parent=0
    _
  %s5 = ssub.s32 1, %s3
  %s6 = scalar_select 0, %s5, %s3
  $region1: #{head_forward.1} parent=0
    #allocation2 [shape = 'u8[786432]{0}', space=vmem, size = 0xc0000, scoped, tag = 'input window, operand 0']
    #allocation3 [shape = 's32[2]{0}', space=sflag, size = 0x8, scoped, tag = 'scoped memory for head_forward.1']
    %7 = vsyncpa [#allocation3], 0
    %s8 = scalar_lea.sflag [#allocation3], 1
    %9 = vsyncpa %s8, 0
    loop: start=0, step=1, limit=4
    $region2: #{head_forward.1} parent=1 // loop_pre_header
      _
    $region3: #{head_forward.1} parent=1 // loop_header
      %s11 = sphi 0, %s15
      %p12 = scmp.ge.s32.totalorder %s11, 4
      %s21 = sphi 0, %s23
      %s24 = sphi 0, %s21
      %s25 = sphi 0, %s24
      %s41 = sphi 0, %s25
      %s45 = sphi 0, %s45
      %s47 = sphi 0, %s45
      %s48 = sphi 0, %s47
      %s62 = sphi 0, %s48
      %s68 = sphi 0, %s70
      %s71 = sphi 0, %s68
      %s72 = sphi 0, %s71
      %s88 = sphi 0, %s72
    $region4: #{head_forward.1} parent=1 // loop_header_branch
      %14 = sbr.rel (%p12) target = $region8
    $region5: #{head_forward.1} parent=1 // loop_body
      %s16 = ssub.s32 %s11, 1
      %s17 = ssub.s32 %s11, 2
      %s18 = sadd.s32 %s11, 1
      %s19 = ssub.s32 %s11, %s18
      %p20 = scmp.eq.s32.totalorder %s19, 0
      %s22 = sadd.s32 %s21, 1
      %s23 = scalar_select %p20, %s21, %s22
      %p26 = pneg %p20
      %p27 = scmp.eq.s32.totalorder %s11, 1
      %p28 = por %p26, %p27
      %p29 = scmp.ne.s32.totalorder %s21, %s24
      %p30 = scmp.eq.s32.totalorder %s11, 0
      %p31 = por %p29, %p30
      %p32 = scmp.ne.s32.totalorder %s21, %s24
      %p33 = scmp.eq.s32.totalorder %s16, 1
      %p34 = por %p32, %p33
      %p35 = scmp.ne.s32.totalorder %s24, %s25
      %p36 = scmp.eq.s32.totalorder %s16, 0
      %p37 = por %p35, %p36
      %p38 = scmp.ne.s32.totalorder %s24, %s25
      %p39 = scmp.eq.s32.totalorder %s17, 1
      %p40 = por %p38, %p39
      %p42 = scmp.ne.s32.totalorder %s25, %s41
      %p43 = scmp.eq.s32.totalorder %s17, 0
      %p44 = por %p42, %p43
      %s46 = sadd.s32 %s45, 1
      %p49 = scmp.eq.s32.totalorder %s11, 1
      %p50 = scmp.ne.s32.totalorder %s45, %s47
      %p51 = scmp.eq.s32.totalorder %s11, 0
      %p52 = por %p50, %p51
      %p53 = scmp.ne.s32.totalorder %s45, %s47
      %p54 = scmp.eq.s32.totalorder %s16, 1
      %p55 = por %p53, %p54
      %p56 = scmp.ne.s32.totalorder %s47, %s48
      %p57 = scmp.eq.s32.totalorder %s16, 0
      %p58 = por %p56, %p57
      %p59 = scmp.ne.s32.totalorder %s47, %s48
      %p60 = scmp.eq.s32.totalorder %s17, 1
      %p61 = por %p59, %p60
      %p63 = scmp.ne.s32.totalorder %s48, %s62
      %p64 = scmp.eq.s32.totalorder %s17, 0
      %p65 = por %p63, %p64
      %s66 = ssub.s32 %s11, %s18
      %p67 = scmp.eq.s32.totalorder %s66, 0
      %s69 = sadd.s32 %s68, 1
      %s70 = scalar_select %p67, %s68, %s69
      %p73 = pneg %p67
      %p74 = scmp.eq.s32.totalorder %s11, 1
      %p75 = por %p73, %p74
      %p76 = scmp.ne.s32.totalorder %s68, %s71
      %p77 = scmp.eq.s32.totalorder %s11, 0
      %p78 = por %p76, %p77
      %p79 = scmp.ne.s32.totalorder %s68, %s71
      %p80 = scmp.eq.s32.totalorder %s16, 1
      %p81 = por %p79, %p80
      %p82 = scmp.ne.s32.totalorder %s71, %s72
      %p83 = scmp.eq.s32.totalorder %s16, 0
      %p84 = por %p82, %p83
      %p85 = scmp.ne.s32.totalorder %s71, %s72
      %p86 = scmp.eq.s32.totalorder %s17, 1
      %p87 = por %p85, %p86
      %p89 = scmp.ne.s32.totalorder %s72, %s88
      %p90 = scmp.eq.s32.totalorder %s17, 0
      %p91 = por %p89, %p90
      %p92 = scmp.le.s32.totalorder 1, %s11
      %p93 = scmp.lt.s32.totalorder %s11, 3
      %p94 = pnand %p92, %p93
      %p95 = pneg %p94
      // Predicated region
      $region9: #{head_forward.1} parent=5 // pred_check
        _
      $region10: #{head_forward.1} parent=5 // pred_check_branch
        %97 = sbr.rel (%p94) target = $region12
      $region11: #{head_forward.1} parent=5 // pred_region
        %s98 = ssub.s32 %s11, 1
        // Predicated region
        $region13: #{head_forward.1} parent=11 // pred_check
          %p99 = pneg %p58
        $region14: #{head_forward.1} parent=11 // pred_check_branch
          %101 = sbr.rel (%p99) target = $region16
        $region15: #{head_forward.1} parent=11 // pred_region
          _
        $region16: #{head_forward.1} parent=11 // pred_fallthru
          _
      $region12: #{head_forward.1} parent=5 // pred_fallthru
        _
      %p102 = scmp.lt.s32.totalorder %s11, 2
      // Predicated region
      $region17: #{head_forward.1} parent=5 // pred_check
        %p103 = pneg %p102
      $region18: #{head_forward.1} parent=5 // pred_check_branch
        %105 = sbr.rel (%p103) target = $region20
      $region19: #{head_forward.1} parent=5 // pred_region
        // Predicated region
        $region21: #{head_forward.1} parent=19 // pred_check
          %p106 = pneg %p31
        $region22: #{head_forward.1} parent=19 // pred_check_branch
          %108 = sbr.rel (%p106) target = $region24
        $region23: #{head_forward.1} parent=19 // pred_region
          %s109 = sand.u32 %s21, 1
          %s110 = scalar_lea.sflag [#allocation3], %s109
          %s111 = sand.u32 %s21, 1
          %s112 = smul.addr %s111, 768
          %s113 = scalar_lea.vmem [#allocation2], %s112
          %s115 = ssub.s32 12288, 12288
          %116 = vsyncadd %s110, %s115
          %s117 = smul.addr %s11, 96
          %s118 = smul.addr %s117, 128
          %s119 = scalar_lea.hbm %s0, %s118
          %s120 = sshll.u32 %s113, 4
          %s121 = int_to_ptr.vmem [resolvable:$true] %s120
          %126 = dma.hbm_to_vmem [thread:$0]  %s119, 12288, %s121, %s110, 384, 384, 24
        $region24: #{head_forward.1} parent=19 // pred_fallthru
          _
      $region20: #{head_forward.1} parent=5 // pred_fallthru
        _
      %p127 = scmp.le.s32.totalorder 1, %s11
      %p128 = scmp.lt.s32.totalorder %s11, 3
      %p129 = pnand %p127, %p128
      %p130 = pneg %p129
      // Predicated region
      $region25: #{head_forward.1} parent=5 // pred_check
        _
      $region26: #{head_forward.1} parent=5 // pred_check_branch
        %132 = sbr.rel (%p129) target = $region28
      $region27: #{head_forward.1} parent=5 // pred_region
        %s133 = ssub.s32 %s11, 1
        %s134 = sand.u32 %s24, 1
        %s135 = scalar_lea.sflag [#allocation3], %s134
        %s136 = sand.u32 %s24, 1
        %s137 = smul.addr %s136, 768
        %s138 = scalar_lea.vmem [#allocation2], %s137
        // Predicated region
        $region29: #{head_forward.1} parent=27 // pred_check
          %p139 = pneg %p37
        $region30: #{head_forward.1} parent=27 // pred_check_branch
          %141 = sbr.rel (%p139) target = $region32
        $region31: #{head_forward.1} parent=27 // pred_region
          %142 = dma.done %s135, 12288
        $region32: #{head_forward.1} parent=27 // pred_fallthru
          _
        %s143 = sand.u32 %s24, 1
        %s144 = scalar_lea.sflag [#allocation3], %s143
        %s145 = sand.u32 %s24, 1
        %s146 = smul.addr %s145, 768
        %s147 = scalar_lea.vmem [#allocation2], %s146
        %p148 = pneg %p37
        %p149 = pneg %p34
        %p150 = pneg %p58
        %p151 = pneg %p55
        %p152 = pneg %p84
        %p153 = pneg %p81
        %p154 = scmp.lt.s32.totalorder %s16, 1
        %s155 = scalar_select %p154, %s16, 1
        %s156 = smul.addr %s155, 32
        %s157 = smul.addr %s156, 8
        %s158 = scalar_lea.vmem %s2, %s157
        %p159 = scmp.lt.s32.totalorder %s16, 1
        %s160 = scalar_select %p159, %s16, 1
        %s161 = smul.addr %s160, 32
        %s162 = smul.addr %s161, 8
        %s163 = scalar_lea.vmem %s2, %s162
        %v165 = vld [vmem:[%s138] sm:$0xff]
        %v166 = vld [vmem:[%s138 + $0x8] sm:$0xff]
        %v167 = vld [vmem:[%s138 + $0x10] sm:$0xff]
        %v168 = vld [vmem:[%s138 + $0x18] sm:$0xff]
        %v169 = vld [vmem:[%s138 + $0x20] sm:$0xff]
        %v170 = vld [vmem:[%s138 + $0x28] sm:$0xff]
        %v171 = vld [vmem:[%s138 + $0x30] sm:$0xff]
        %v172 = vld [vmem:[%s138 + $0x38] sm:$0xff]
        %v173 = vld [vmem:[%s138 + $0x40] sm:$0xff]
        %v174 = vld [vmem:[%s138 + $0x48] sm:$0xff]
        %v175 = vld [vmem:[%s138 + $0x50] sm:$0xff]
        %v176 = vld [vmem:[%s138 + $0x58] sm:$0xff]
        %v177 = vld [vmem:[%s138 + $0x60] sm:$0xff]
        %v178 = vld [vmem:[%s138 + $0x68] sm:$0xff]
        %v179 = vld [vmem:[%s138 + $0x70] sm:$0xff]
        %v180 = vld [vmem:[%s138 + $0x78] sm:$0xff]
        %v181 = vld [vmem:[%s138 + $0x80] sm:$0xff]
        %v182 = vld [vmem:[%s138 + $0x88] sm:$0xff]
        %v183 = vld [vmem:[%s138 + $0x90] sm:$0xff]
        %v184 = vld [vmem:[%s138 + $0x98] sm:$0xff]
        %v185 = vld [vmem:[%s138 + $0xa0] sm:$0xff]
        %v186 = vld [vmem:[%s138 + $0xa8] sm:$0xff]
        %v187 = vld [vmem:[%s138 + $0xb0] sm:$0xff]
        %v188 = vld [vmem:[%s138 + $0xb8] sm:$0xff]
        %v189 = vld [vmem:[%s138 + $0xc0] sm:$0xff]
        %v190 = vld [vmem:[%s138 + $0xc8] sm:$0xff]
        %v191 = vld [vmem:[%s138 + $0xd0] sm:$0xff]
        %v192 = vld [vmem:[%s138 + $0xd8] sm:$0xff]
        %v193 = vld [vmem:[%s138 + $0xe0] sm:$0xff]
        %v194 = vld [vmem:[%s138 + $0xe8] sm:$0xff]
        %v195 = vld [vmem:[%s138 + $0xf0] sm:$0xff]
        %v196 = vld [vmem:[%s138 + $0xf8] sm:$0xff]
        %v197 = vld [vmem:[%s138 + $0x100] sm:$0xff]
        %v198 = vld [vmem:[%s138 + $0x108] sm:$0xff]
        %v199 = vld [vmem:[%s138 + $0x110] sm:$0xff]
        %v200 = vld [vmem:[%s138 + $0x118] sm:$0xff]
        %v201 = vld [vmem:[%s138 + $0x120] sm:$0xff]
        %v202 = vld [vmem:[%s138 + $0x128] sm:$0xff]
        %v203 = vld [vmem:[%s138 + $0x130] sm:$0xff]
        %v204 = vld [vmem:[%s138 + $0x138] sm:$0xff]
        %v205 = vld [vmem:[%s138 + $0x140] sm:$0xff]
        %v206 = vld [vmem:[%s138 + $0x148] sm:$0xff]
        %v207 = vld [vmem:[%s138 + $0x150] sm:$0xff]
        %v208 = vld [vmem:[%s138 + $0x158] sm:$0xff]
        %v209 = vld [vmem:[%s138 + $0x160] sm:$0xff]
        %v210 = vld [vmem:[%s138 + $0x168] sm:$0xff]
        %v211 = vld [vmem:[%s138 + $0x170] sm:$0xff]
        %v212 = vld [vmem:[%s138 + $0x178] sm:$0xff]
        %v213 = vld [vmem:[%s138 + $0x180] sm:$0xff]
        %v214 = vld [vmem:[%s138 + $0x188] sm:$0xff]
        %v215 = vld [vmem:[%s138 + $0x190] sm:$0xff]
        %v216 = vld [vmem:[%s138 + $0x198] sm:$0xff]
        %v217 = vld [vmem:[%s138 + $0x1a0] sm:$0xff]
        %v218 = vld [vmem:[%s138 + $0x1a8] sm:$0xff]
        %v219 = vld [vmem:[%s138 + $0x1b0] sm:$0xff]
        %v220 = vld [vmem:[%s138 + $0x1b8] sm:$0xff]
        %v221 = vld [vmem:[%s138 + $0x1c0] sm:$0xff]
        %v222 = vld [vmem:[%s138 + $0x1c8] sm:$0xff]
        %v223 = vld [vmem:[%s138 + $0x1d0] sm:$0xff]
        %v224 = vld [vmem:[%s138 + $0x1d8] sm:$0xff]
        %v225 = vld [vmem:[%s138 + $0x1e0] sm:$0xff]
        %v226 = vld [vmem:[%s138 + $0x1e8] sm:$0xff]
        %v227 = vld [vmem:[%s138 + $0x1f0] sm:$0xff]
        %v228 = vld [vmem:[%s138 + $0x1f8] sm:$0xff]
        %v229 = vld [vmem:[%s138 + $0x200] sm:$0xff]
        %v230 = vld [vmem:[%s138 + $0x208] sm:$0xff]
        %v231 = vld [vmem:[%s138 + $0x210] sm:$0xff]
        %v232 = vld [vmem:[%s138 + $0x218] sm:$0xff]
        %v233 = vld [vmem:[%s138 + $0x220] sm:$0xff]
        %v234 = vld [vmem:[%s138 + $0x228] sm:$0xff]
        %v235 = vld [vmem:[%s138 + $0x230] sm:$0xff]
        %v236 = vld [vmem:[%s138 + $0x238] sm:$0xff]
        %v237 = vld [vmem:[%s138 + $0x240] sm:$0xff]
        %v238 = vld [vmem:[%s138 + $0x248] sm:$0xff]
        %v239 = vld [vmem:[%s138 + $0x250] sm:$0xff]
        %v240 = vld [vmem:[%s138 + $0x258] sm:$0xff]
        %v241 = vld [vmem:[%s138 + $0x260] sm:$0xff]
        %v242 = vld [vmem:[%s138 + $0x268] sm:$0xff]
        %v243 = vld [vmem:[%s138 + $0x270] sm:$0xff]
        %v244 = vld [vmem:[%s138 + $0x278] sm:$0xff]
        %v245 = vld [vmem:[%s138 + $0x280] sm:$0xff]
        %v246 = vld [vmem:[%s138 + $0x288] sm:$0xff]
        %v247 = vld [vmem:[%s138 + $0x290] sm:$0xff]
        %v248 = vld [vmem:[%s138 + $0x298] sm:$0xff]
        %v249 = vld [vmem:[%s138 + $0x2a0] sm:$0xff]
        %v250 = vld [vmem:[%s138 + $0x2a8] sm:$0xff]
        %v251 = vld [vmem:[%s138 + $0x2b0] sm:$0xff]
        %v252 = vld [vmem:[%s138 + $0x2b8] sm:$0xff]
        %v253 = vld [vmem:[%s138 + $0x2c0] sm:$0xff]
        %v254 = vld [vmem:[%s138 + $0x2c8] sm:$0xff]
        %v255 = vld [vmem:[%s138 + $0x2d0] sm:$0xff]
        %v256 = vld [vmem:[%s138 + $0x2d8] sm:$0xff]
        %v257 = vld [vmem:[%s138 + $0x2e0] sm:$0xff]
        %v258 = vld [vmem:[%s138 + $0x2e8] sm:$0xff]
        %v259 = vld [vmem:[%s138 + $0x2f0] sm:$0xff]
        %v260 = vld [vmem:[%s138 + $0x2f8] sm:$0xff]
        %v261 = vpack.c.bf16 %v168, %v165
        %v262 = vpack.c.bf16 %v169, %v166
        %v263 = vpack.c.bf16 %v170, %v167
        %v264 = vpack.c.bf16 %v174, %v171
        %v265 = vpack.c.bf16 %v175, %v172
        %v266 = vpack.c.bf16 %v176, %v173
        %v267 = vpack.c.bf16 %v180, %v177
        %v268 = vpack.c.bf16 %v181, %v178
        %v269 = vpack.c.bf16 %v182, %v179
        %v270 = vpack.c.bf16 %v186, %v183
        %v271 = vpack.c.bf16 %v187, %v184
        %v272 = vpack.c.bf16 %v188, %v185
        %v273 = vpack.c.bf16 %v192, %v189
        %v274 = vpack.c.bf16 %v193, %v190
        %v275 = vpack.c.bf16 %v194, %v191
        %v276 = vpack.c.bf16 %v198, %v195
        %v277 = vpack.c.bf16 %v199, %v196
        %v278 = vpack.c.bf16 %v200, %v197
        %v279 = vpack.c.bf16 %v204, %v201
        %v280 = vpack.c.bf16 %v205, %v202
        %v281 = vpack.c.bf16 %v206, %v203
        %v282 = vpack.c.bf16 %v210, %v207
        %v283 = vpack.c.bf16 %v211, %v208
        %v284 = vpack.c.bf16 %v212, %v209
        %v285 = vpack.c.bf16 %v216, %v213
        %v286 = vpack.c.bf16 %v217, %v214
        %v287 = vpack.c.bf16 %v218, %v215
        %v288 = vpack.c.bf16 %v222, %v219
        %v289 = vpack.c.bf16 %v223, %v220
        %v290 = vpack.c.bf16 %v224, %v221
        %v291 = vpack.c.bf16 %v228, %v225
        %v292 = vpack.c.bf16 %v229, %v226
        %v293 = vpack.c.bf16 %v230, %v227
        %v294 = vpack.c.bf16 %v234, %v231
        %v295 = vpack.c.bf16 %v235, %v232
        %v296 = vpack.c.bf16 %v236, %v233
        %v297 = vpack.c.bf16 %v240, %v237
        %v298 = vpack.c.bf16 %v241, %v238
        %v299 = vpack.c.bf16 %v242, %v239
        %v300 = vpack.c.bf16 %v246, %v243
        %v301 = vpack.c.bf16 %v247, %v244
        %v302 = vpack.c.bf16 %v248, %v245
        %v303 = vpack.c.bf16 %v252, %v249
        %v304 = vpack.c.bf16 %v253, %v250
        %v305 = vpack.c.bf16 %v254, %v251
        %v306 = vpack.c.bf16 %v258, %v255
        %v307 = vpack.c.bf16 %v259, %v256
        %v308 = vpack.c.bf16 %v260, %v257
        %v309 = vld [vmem:[%s1] sm:$0xff]
        %v310 = vld [vmem:[%s1 + $0x8] sm:$0xff]
        %v311 = vld [vmem:[%s1 + $0x10] sm:$0xff]
        %v312 = vld [vmem:[%s1 + $0x18] sm:$0xff]
        %v313 = vld [vmem:[%s1 + $0x20] sm:$0xff]
        %v314 = vld [vmem:[%s1 + $0x28] sm:$0xff]
        %v315 = vld [vmem:[%s1 + $0x30] sm:$0xff]
        %v316 = vld [vmem:[%s1 + $0x38] sm:$0xff]
        %v317 = vld [vmem:[%s1 + $0x40] sm:$0xff]
        %v318 = vld [vmem:[%s1 + $0x48] sm:$0xff]
        %v319 = vld [vmem:[%s1 + $0x50] sm:$0xff]
        %v320 = vld [vmem:[%s1 + $0x58] sm:$0xff]
        %v321 = vld [vmem:[%s1 + $0x60] sm:$0xff]
        %v322 = vld [vmem:[%s1 + $0x68] sm:$0xff]
        %v323 = vld [vmem:[%s1 + $0x70] sm:$0xff]
        %v324 = vld [vmem:[%s1 + $0x78] sm:$0xff]
        %v325 = vld [vmem:[%s1 + $0x80] sm:$0xff]
        %v326 = vld [vmem:[%s1 + $0x88] sm:$0xff]
        %v327 = vld [vmem:[%s1 + $0x90] sm:$0xff]
        %v328 = vld [vmem:[%s1 + $0x98] sm:$0xff]
        %v329 = vld [vmem:[%s1 + $0xa0] sm:$0xff]
        %v330 = vld [vmem:[%s1 + $0xa8] sm:$0xff]
        %v331 = vld [vmem:[%s1 + $0xb0] sm:$0xff]
        %v332 = vld [vmem:[%s1 + $0xb8] sm:$0xff]
        %v333 = vld [vmem:[%s1 + $0xc0] sm:$0xff]
        %v334 = vld [vmem:[%s1 + $0xc8] sm:$0xff]
        %v335 = vld [vmem:[%s1 + $0xd0] sm:$0xff]
        %v336 = vld [vmem:[%s1 + $0xd8] sm:$0xff]
        %v337 = vld [vmem:[%s1 + $0xe0] sm:$0xff]
        %v338 = vld [vmem:[%s1 + $0xe8] sm:$0xff]
        %v339 = vld [vmem:[%s1 + $0xf0] sm:$0xff]
        %v340 = vld [vmem:[%s1 + $0xf8] sm:$0xff]
        %v341 = vld [vmem:[%s1 + $0x100] sm:$0xff]
        %v342 = vld [vmem:[%s1 + $0x108] sm:$0xff]
        %v343 = vld [vmem:[%s1 + $0x110] sm:$0xff]
        %v344 = vld [vmem:[%s1 + $0x118] sm:$0xff]
        %v345 = vld [vmem:[%s1 + $0x120] sm:$0xff]
        %v346 = vld [vmem:[%s1 + $0x128] sm:$0xff]
        %v347 = vld [vmem:[%s1 + $0x130] sm:$0xff]
        %v348 = vld [vmem:[%s1 + $0x138] sm:$0xff]
        %v349 = vld [vmem:[%s1 + $0x140] sm:$0xff]
        %v350 = vld [vmem:[%s1 + $0x148] sm:$0xff]
        %v351 = vld [vmem:[%s1 + $0x150] sm:$0xff]
        %v352 = vld [vmem:[%s1 + $0x158] sm:$0xff]
        %v353 = vld [vmem:[%s1 + $0x160] sm:$0xff]
        %v354 = vld [vmem:[%s1 + $0x168] sm:$0xff]
        %v355 = vld [vmem:[%s1 + $0x170] sm:$0xff]
        %v356 = vld [vmem:[%s1 + $0x178] sm:$0xff]
        %v405 = vunpack.c.l.b16 %v309
        %v406 = vunpack.c.h.b16 %v309
        %v407 = vunpack.c.l.b16 %v310
        %v408 = vunpack.c.h.b16 %v310
        %v409 = vunpack.c.l.b16 %v311
        %v410 = vunpack.c.h.b16 %v311
        %v411 = vunpack.c.l.b16 %v312
        %v412 = vunpack.c.h.b16 %v312
        %v413 = vunpack.c.l.b16 %v313
        %v414 = vunpack.c.h.b16 %v313
        %v415 = vunpack.c.l.b16 %v314
        %v416 = vunpack.c.h.b16 %v314
        %v417 = vunpack.c.l.b16 %v315
        %v418 = vunpack.c.h.b16 %v315
        %v419 = vunpack.c.l.b16 %v316
        %v420 = vunpack.c.h.b16 %v316
        %v421 = vunpack.c.l.b16 %v317
        %v422 = vunpack.c.h.b16 %v317
        %v423 = vunpack.c.l.b16 %v318
        %v424 = vunpack.c.h.b16 %v318
        %v425 = vunpack.c.l.b16 %v319
        %v426 = vunpack.c.h.b16 %v319
        %v427 = vunpack.c.l.b16 %v320
        %v428 = vunpack.c.h.b16 %v320
        %v429 = vunpack.c.l.b16 %v321
        %v430 = vunpack.c.h.b16 %v321
        %v431 = vunpack.c.l.b16 %v322
        %v432 = vunpack.c.h.b16 %v322
        %v433 = vunpack.c.l.b16 %v323
        %v434 = vunpack.c.h.b16 %v323
        %v435 = vunpack.c.l.b16 %v324
        %v436 = vunpack.c.h.b16 %v324
        %v437 = vunpack.c.l.b16 %v325
        %v438 = vunpack.c.h.b16 %v325
        %v439 = vunpack.c.l.b16 %v326
        %v440 = vunpack.c.h.b16 %v326
        %v441 = vunpack.c.l.b16 %v327
        %v442 = vunpack.c.h.b16 %v327
        %v443 = vunpack.c.l.b16 %v328
        %v444 = vunpack.c.h.b16 %v328
        %v445 = vunpack.c.l.b16 %v329
        %v446 = vunpack.c.h.b16 %v329
        %v447 = vunpack.c.l.b16 %v330
        %v448 = vunpack.c.h.b16 %v330
        %v449 = vunpack.c.l.b16 %v331
        %v450 = vunpack.c.h.b16 %v331
        %v451 = vunpack.c.l.b16 %v332
        %v452 = vunpack.c.h.b16 %v332
        %v453 = vunpack.c.l.b16 %v333
        %v454 = vunpack.c.h.b16 %v333
        %v455 = vunpack.c.l.b16 %v334
        %v456 = vunpack.c.h.b16 %v334
        %v457 = vunpack.c.l.b16 %v335
        %v458 = vunpack.c.h.b16 %v335
        %v459 = vunpack.c.l.b16 %v336
        %v460 = vunpack.c.h.b16 %v336
        %v461 = vunpack.c.l.b16 %v337
        %v462 = vunpack.c.h.b16 %v337
        %v463 = vunpack.c.l.b16 %v338
        %v464 = vunpack.c.h.b16 %v338
        %v465 = vunpack.c.l.b16 %v339
        %v466 = vunpack.c.h.b16 %v339
        %v467 = vunpack.c.l.b16 %v340
        %v468 = vunpack.c.h.b16 %v340
        %v469 = vunpack.c.l.b16 %v341
        %v470 = vunpack.c.h.b16 %v341
        %v471 = vunpack.c.l.b16 %v342
        %v472 = vunpack.c.h.b16 %v342
        %v473 = vunpack.c.l.b16 %v343
        %v474 = vunpack.c.h.b16 %v343
        %v475 = vunpack.c.l.b16 %v344
        %v476 = vunpack.c.h.b16 %v344
        %v477 = vunpack.c.l.b16 %v345
        %v478 = vunpack.c.h.b16 %v345
        %v479 = vunpack.c.l.b16 %v346
        %v480 = vunpack.c.h.b16 %v346
        %v481 = vunpack.c.l.b16 %v347
        %v482 = vunpack.c.h.b16 %v347
        %v483 = vunpack.c.l.b16 %v348
        %v484 = vunpack.c.h.b16 %v348
        %v485 = vunpack.c.l.b16 %v349
        %v486 = vunpack.c.h.b16 %v349
        %v487 = vunpack.c.l.b16 %v350
        %v488 = vunpack.c.h.b16 %v350
        %v489 = vunpack.c.l.b16 %v351
        %v490 = vunpack.c.h.b16 %v351
        %v491 = vunpack.c.l.b16 %v352
        %v492 = vunpack.c.h.b16 %v352
        %v493 = vunpack.c.l.b16 %v353
        %v494 = vunpack.c.h.b16 %v353
        %v495 = vunpack.c.l.b16 %v354
        %v496 = vunpack.c.h.b16 %v354
        %v497 = vunpack.c.l.b16 %v355
        %v498 = vunpack.c.h.b16 %v355
        %v499 = vunpack.c.l.b16 %v356
        %v500 = vunpack.c.h.b16 %v356
        %v501 = vpack.c.b16 %v407, %v405
        %v502 = vpack.c.b16 %v408, %v406
        %v503 = vpack.c.b16 %v411, %v409
        %v504 = vpack.c.b16 %v412, %v410
        %v505 = vpack.c.b16 %v415, %v413
        %v506 = vpack.c.b16 %v416, %v414
        %v507 = vpack.c.b16 %v419, %v417
        %v508 = vpack.c.b16 %v420, %v418
        %v509 = vpack.c.b16 %v423, %v421
        %v510 = vpack.c.b16 %v424, %v422
        %v511 = vpack.c.b16 %v427, %v425
        %v512 = vpack.c.b16 %v428, %v426
        %v513 = vpack.c.b16 %v431, %v429
        %v514 = vpack.c.b16 %v432, %v430
        %v515 = vpack.c.b16 %v435, %v433
        %v516 = vpack.c.b16 %v436, %v434
        %v517 = vpack.c.b16 %v439, %v437
        %v518 = vpack.c.b16 %v440, %v438
        %v519 = vpack.c.b16 %v443, %v441
        %v520 = vpack.c.b16 %v444, %v442
        %v521 = vpack.c.b16 %v447, %v445
        %v522 = vpack.c.b16 %v448, %v446
        %v523 = vpack.c.b16 %v451, %v449
        %v524 = vpack.c.b16 %v452, %v450
        %v525 = vpack.c.b16 %v455, %v453
        %v526 = vpack.c.b16 %v456, %v454
        %v527 = vpack.c.b16 %v459, %v457
        %v528 = vpack.c.b16 %v460, %v458
        %v529 = vpack.c.b16 %v463, %v461
        %v530 = vpack.c.b16 %v464, %v462
        %v531 = vpack.c.b16 %v467, %v465
        %v532 = vpack.c.b16 %v468, %v466
        %v533 = vpack.c.b16 %v471, %v469
        %v534 = vpack.c.b16 %v472, %v470
        %v535 = vpack.c.b16 %v475, %v473
        %v536 = vpack.c.b16 %v476, %v474
        %v537 = vpack.c.b16 %v479, %v477
        %v538 = vpack.c.b16 %v480, %v478
        %v539 = vpack.c.b16 %v483, %v481
        %v540 = vpack.c.b16 %v484, %v482
        %v541 = vpack.c.b16 %v487, %v485
        %v542 = vpack.c.b16 %v488, %v486
        %v543 = vpack.c.b16 %v491, %v489
        %v544 = vpack.c.b16 %v492, %v490
        %v545 = vpack.c.b16 %v495, %v493
        %v546 = vpack.c.b16 %v496, %v494
        %v547 = vpack.c.b16 %v499, %v497
        %v548 = vpack.c.b16 %v500, %v498
        %597 = vmatprep.subr.bf16.mxu0 %v502
        %598 = vmatpush1.bf16.msra.mxu0 %v501
        %599 = vmatprep.subr.bf16.mxu0 %v504
        %600 = vmatpush1.bf16.msra.mxu0 %v503
        %601 = vmatprep.subr.bf16.mxu0 %v506
        %602 = vmatpush1.bf16.msra.mxu0 %v505
        %603 = vmatprep.subr.bf16.mxu0 %v508
        %604 = vmatpush1.bf16.msra.mxu0 %v507
        %605 = vmatprep.subr.bf16.mxu0 %v510
        %606 = vmatpush1.bf16.msra.mxu0 %v509
        %607 = vmatprep.subr.bf16.mxu0 %v512
        %608 = vmatpush1.bf16.msra.mxu0 %v511
        %609 = vmatprep.subr.bf16.mxu0 %v514
        %610 = vmatpush1.bf16.msra.mxu0 %v513
        %611 = vmatprep.subr.bf16.mxu0 %v516
        %612 = vmatpush1.bf16.msra.mxu0 %v515
        %613 = vmatprep.subr.bf16.mxu0 %v518
        %614 = vmatpush1.bf16.msra.mxu0 %v517
        %615 = vmatprep.subr.bf16.mxu0 %v520
        %616 = vmatpush1.bf16.msra.mxu0 %v519
        %617 = vmatprep.subr.bf16.mxu0 %v522
        %618 = vmatpush1.bf16.msra.mxu0 %v521
        %619 = vmatprep.subr.bf16.mxu0 %v524
        %620 = vmatpush1.bf16.msra.mxu0 %v523
        %621 = vmatprep.subr.bf16.mxu0 %v526
        %622 = vmatpush1.bf16.msra.mxu0 %v525
        %623 = vmatprep.subr.bf16.mxu0 %v528
        %624 = vmatpush1.bf16.msra.mxu0 %v527
        %625 = vmatprep.subr.bf16.mxu0 %v530
        %626 = vmatpush1.bf16.msra.mxu0 %v529
        %627 = vmatprep.subr.bf16.mxu0 %v532
        %628 = vmatpush1.bf16.msra.mxu0 %v531
        %629 = vmatprep.mubr.bf16.mxu0 %v262
        %630 = vmatmul.mubr.bf16.gmra.mrb[0].mxu0 %v261
        %v631 = vpop.f32.mrb[0].mxu0
        %v632 = vadd.f32 0.0, %v631
        %v633 = vpop.f32.mrb[0].mxu0
        %v634 = vadd.f32 0.0, %v633
        %v635 = vpop.f32.mrb[0].mxu0
        %v636 = vadd.f32 0.0, %v635
        %v637 = vpop.f32.mrb[0].mxu0
        %v638 = vadd.f32 0.0, %v637
        %639 = vmatprep.mubr.bf16.mxu0 %v265
        %640 = vmatmul.mubr.bf16.gmra.mrb[0].mxu0 %v264
        %v641 = vpop.f32.mrb[0].mxu0
        %v642 = vadd.f32 0.0, %v641
        %v643 = vpop.f32.mrb[0].mxu0
        %v644 = vadd.f32 0.0, %v643
        %v645 = vpop.f32.mrb[0].mxu0
        %v646 = vadd.f32 0.0, %v645
        %v647 = vpop.f32.mrb[0].mxu0
        %v648 = vadd.f32 0.0, %v647
        %649 = vmatprep.mubr.bf16.mxu0 %v268
        %650 = vmatmul.mubr.bf16.gmra.mrb[0].mxu0 %v267
        %v651 = vpop.f32.mrb[0].mxu0
        %v652 = vadd.f32 0.0, %v651
        %v653 = vpop.f32.mrb[0].mxu0
        %v654 = vadd.f32 0.0, %v653
        %v655 = vpop.f32.mrb[0].mxu0
        %v656 = vadd.f32 0.0, %v655
        %v657 = vpop.f32.mrb[0].mxu0
        %v658 = vadd.f32 0.0, %v657
        %659 = vmatprep.mubr.bf16.mxu0 %v271
        %660 = vmatmul.mubr.bf16.gmra.mrb[0].mxu0 %v270
        %v661 = vpop.f32.mrb[0].mxu0
        %v662 = vadd.f32 0.0, %v661
        %v663 = vpop.f32.mrb[0].mxu0
        %v664 = vadd.f32 0.0, %v663
        %v665 = vpop.f32.mrb[0].mxu0
        %v666 = vadd.f32 0.0, %v665
        %v667 = vpop.f32.mrb[0].mxu0
        %v668 = vadd.f32 0.0, %v667
        %669 = vmatprep.mubr.bf16.mxu0 %v274
        %670 = vmatmul.mubr.bf16.gmra.mrb[0].mxu0 %v273
        %v671 = vpop.f32.mrb[0].mxu0
        %v672 = vadd.f32 0.0, %v671
        %v673 = vpop.f32.mrb[0].mxu0
        %v674 = vadd.f32 0.0, %v673
        %v675 = vpop.f32.mrb[0].mxu0
        %v676 = vadd.f32 0.0, %v675
        %v677 = vpop.f32.mrb[0].mxu0
        %v678 = vadd.f32 0.0, %v677
        %679 = vmatprep.mubr.bf16.mxu0 %v277
        %680 = vmatmul.mubr.bf16.gmra.mrb[0].mxu0 %v276
        %v681 = vpop.f32.mrb[0].mxu0
        %v682 = vadd.f32 0.0, %v681
        %v683 = vpop.f32.mrb[0].mxu0
        %v684 = vadd.f32 0.0, %v683
        %v685 = vpop.f32.mrb[0].mxu0
        %v686 = vadd.f32 0.0, %v685
        %v687 = vpop.f32.mrb[0].mxu0
        %v688 = vadd.f32 0.0, %v687
        %689 = vmatprep.mubr.bf16.mxu0 %v280
        %690 = vmatmul.mubr.bf16.gmra.mrb[0].mxu0 %v279
        %v691 = vpop.f32.mrb[0].mxu0
        %v692 = vadd.f32 0.0, %v691
        %v693 = vpop.f32.mrb[0].mxu0
        %v694 = vadd.f32 0.0, %v693
        %v695 = vpop.f32.mrb[0].mxu0
        %v696 = vadd.f32 0.0, %v695
        %v697 = vpop.f32.mrb[0].mxu0
        %v698 = vadd.f32 0.0, %v697
        %699 = vmatprep.mubr.bf16.mxu0 %v283
        %700 = vmatmul.mubr.bf16.gmra.mrb[0].mxu0 %v282
        %v701 = vpop.f32.mrb[0].mxu0
        %v702 = vadd.f32 0.0, %v701
        %v703 = vpop.f32.mrb[0].mxu0
        %v704 = vadd.f32 0.0, %v703
        %v705 = vpop.f32.mrb[0].mxu0
        %v706 = vadd.f32 0.0, %v705
        %v707 = vpop.f32.mrb[0].mxu0
        %v708 = vadd.f32 0.0, %v707
        %709 = vmatprep.mubr.bf16.mxu0 %v286
        %710 = vmatmul.mubr.bf16.gmra.mrb[0].mxu0 %v285
        %v711 = vpop.f32.mrb[0].mxu0
        %v712 = vadd.f32 0.0, %v711
        %v713 = vpop.f32.mrb[0].mxu0
        %v714 = vadd.f32 0.0, %v713
        %v715 = vpop.f32.mrb[0].mxu0
        %v716 = vadd.f32 0.0, %v715
        %v717 = vpop.f32.mrb[0].mxu0
        %v718 = vadd.f32 0.0, %v717
        %719 = vmatprep.mubr.bf16.mxu0 %v289
        %720 = vmatmul.mubr.bf16.gmra.mrb[0].mxu0 %v288
        %v721 = vpop.f32.mrb[0].mxu0
        %v722 = vadd.f32 0.0, %v721
        %v723 = vpop.f32.mrb[0].mxu0
        %v724 = vadd.f32 0.0, %v723
        %v725 = vpop.f32.mrb[0].mxu0
        %v726 = vadd.f32 0.0, %v725
        %v727 = vpop.f32.mrb[0].mxu0
        %v728 = vadd.f32 0.0, %v727
        %729 = vmatprep.mubr.bf16.mxu0 %v292
        %730 = vmatmul.mubr.bf16.gmra.mrb[0].mxu0 %v291
        %v731 = vpop.f32.mrb[0].mxu0
        %v732 = vadd.f32 0.0, %v731
        %v733 = vpop.f32.mrb[0].mxu0
        %v734 = vadd.f32 0.0, %v733
        %v735 = vpop.f32.mrb[0].mxu0
        %v736 = vadd.f32 0.0, %v735
        %v737 = vpop.f32.mrb[0].mxu0
        %v738 = vadd.f32 0.0, %v737
        %739 = vmatprep.mubr.bf16.mxu0 %v295
        %740 = vmatmul.mubr.bf16.gmra.mrb[0].mxu0 %v294
        %v741 = vpop.f32.mrb[0].mxu0
        %v742 = vadd.f32 0.0, %v741
        %v743 = vpop.f32.mrb[0].mxu0
        %v744 = vadd.f32 0.0, %v743
        %v745 = vpop.f32.mrb[0].mxu0
        %v746 = vadd.f32 0.0, %v745
        %v747 = vpop.f32.mrb[0].mxu0
        %v748 = vadd.f32 0.0, %v747
        %749 = vmatprep.mubr.bf16.mxu0 %v298
        %750 = vmatmul.mubr.bf16.gmra.mrb[0].mxu0 %v297
        %v751 = vpop.f32.mrb[0].mxu0
        %v752 = vadd.f32 0.0, %v751
        %v753 = vpop.f32.mrb[0].mxu0
        %v754 = vadd.f32 0.0, %v753
        %v755 = vpop.f32.mrb[0].mxu0
        %v756 = vadd.f32 0.0, %v755
        %v757 = vpop.f32.mrb[0].mxu0
        %v758 = vadd.f32 0.0, %v757
        %759 = vmatprep.mubr.bf16.mxu0 %v301
        %760 = vmatmul.mubr.bf16.gmra.mrb[0].mxu0 %v300
        %v761 = vpop.f32.mrb[0].mxu0
        %v762 = vadd.f32 0.0, %v761
        %v763 = vpop.f32.mrb[0].mxu0
        %v764 = vadd.f32 0.0, %v763
        %v765 = vpop.f32.mrb[0].mxu0
        %v766 = vadd.f32 0.0, %v765
        %v767 = vpop.f32.mrb[0].mxu0
        %v768 = vadd.f32 0.0, %v767
        %769 = vmatprep.mubr.bf16.mxu0 %v304
        %770 = vmatmul.mubr.bf16.gmra.mrb[0].mxu0 %v303
        %v771 = vpop.f32.mrb[0].mxu0
        %v772 = vadd.f32 0.0, %v771
        %v773 = vpop.f32.mrb[0].mxu0
        %v774 = vadd.f32 0.0, %v773
        %v775 = vpop.f32.mrb[0].mxu0
        %v776 = vadd.f32 0.0, %v775
        %v777 = vpop.f32.mrb[0].mxu0
        %v778 = vadd.f32 0.0, %v777
        %779 = vmatprep.mubr.bf16.mxu0 %v307
        %780 = vmatmul.mubr.bf16.gmra.mrb[0].mxu0 %v306
        %v781 = vpop.f32.mrb[0].mxu0
        %v782 = vadd.f32 0.0, %v781
        %v783 = vpop.f32.mrb[0].mxu0
        %v784 = vadd.f32 0.0, %v783
        %v785 = vpop.f32.mrb[0].mxu0
        %v786 = vadd.f32 0.0, %v785
        %v787 = vpop.f32.mrb[0].mxu0
        %v788 = vadd.f32 0.0, %v787
        %789 = vdwg.mxu0
        %790 = vmatprep.subr.bf16.mxu0 %v534
        %791 = vmatpush1.bf16.msra.mxu0 %v533
        %792 = vmatprep.subr.bf16.mxu0 %v536
        %793 = vmatpush1.bf16.msra.mxu0 %v535
        %794 = vmatprep.subr.bf16.mxu0 %v538
        %795 = vmatpush1.bf16.msra.mxu0 %v537
        %796 = vmatprep.subr.bf16.mxu0 %v540
        %797 = vmatpush1.bf16.msra.mxu0 %v539
        %798 = vmatprep.subr.bf16.mxu0 %v542
        %799 = vmatpush1.bf16.msra.mxu0 %v541
        %800 = vmatprep.subr.bf16.mxu0 %v544
        %801 = vmatpush1.bf16.msra.mxu0 %v543
        %802 = vmatprep.subr.bf16.mxu0 %v546
        %803 = vmatpush1.bf16.msra.mxu0 %v545
        %804 = vmatprep.subr.bf16.mxu0 %v548
        %805 = vmatpush1.bf16.msra.mxu0 %v547
        %806 = vmatprep.subr.bf16.mxu0 0
        %807 = vmatpush1.bf16.msra.mxu0 0
        %808 = vmatprep.subr.bf16.mxu0 0
        %809 = vmatpush1.bf16.msra.mxu0 0
        %810 = vmatprep.subr.bf16.mxu0 0
        %811 = vmatpush1.bf16.msra.mxu0 0
        %812 = vmatprep.subr.bf16.mxu0 0
        %813 = vmatpush1.bf16.msra.mxu0 0
        %814 = vmatprep.subr.bf16.mxu0 0
        %815 = vmatpush1.bf16.msra.mxu0 0
        %816 = vmatprep.subr.bf16.mxu0 0
        %817 = vmatpush1.bf16.msra.mxu0 0
        %818 = vmatprep.subr.bf16.mxu0 0
        %819 = vmatpush1.bf16.msra.mxu0 0
        %820 = vmatprep.subr.bf16.mxu0 0
        %821 = vmatpush1.bf16.msra.mxu0 0
        %822 = vmatprep.mubr.bf16.mxu0 0
        %823 = vmatmul.mubr.bf16.gmra.mrb[0].mxu0 %v263
        %v824 = vpop.f32.mrb[0].mxu0
        %v825 = vadd.f32 %v632, %v824
        %v826 = vpop.f32.mrb[0].mxu0
        %v827 = vadd.f32 %v634, %v826
        %v828 = vpop.f32.mrb[0].mxu0
        %v829 = vadd.f32 %v636, %v828
        %v830 = vpop.f32.mrb[0].mxu0
        %v831 = vadd.f32 %v638, %v830
        %832 = vmatprep.mubr.bf16.mxu0 0
        %833 = vmatmul.mubr.bf16.gmra.mrb[0].mxu0 %v266
        %v834 = vpop.f32.mrb[0].mxu0
        %v835 = vadd.f32 %v642, %v834
        %v836 = vpop.f32.mrb[0].mxu0
        %v837 = vadd.f32 %v644, %v836
        %v838 = vpop.f32.mrb[0].mxu0
        %v839 = vadd.f32 %v646, %v838
        %v840 = vpop.f32.mrb[0].mxu0
        %v841 = vadd.f32 %v648, %v840
        %842 = vmatprep.mubr.bf16.mxu0 0
        %843 = vmatmul.mubr.bf16.gmra.mrb[0].mxu0 %v269
        %v844 = vpop.f32.mrb[0].mxu0
        %v845 = vadd.f32 %v652, %v844
        %v846 = vpop.f32.mrb[0].mxu0
        %v847 = vadd.f32 %v654, %v846
        %v848 = vpop.f32.mrb[0].mxu0
        %v849 = vadd.f32 %v656, %v848
        %v850 = vpop.f32.mrb[0].mxu0
        %v851 = vadd.f32 %v658, %v850
        %852 = vmatprep.mubr.bf16.mxu0 0
        %853 = vmatmul.mubr.bf16.gmra.mrb[0].mxu0 %v272
        %v854 = vpop.f32.mrb[0].mxu0
        %v855 = vadd.f32 %v662, %v854
        %v856 = vpop.f32.mrb[0].mxu0
        %v857 = vadd.f32 %v664, %v856
        %v858 = vpop.f32.mrb[0].mxu0
        %v859 = vadd.f32 %v666, %v858
        %v860 = vpop.f32.mrb[0].mxu0
        %v861 = vadd.f32 %v668, %v860
        %862 = vmatprep.mubr.bf16.mxu0 0
        %863 = vmatmul.mubr.bf16.gmra.mrb[0].mxu0 %v275
        %v864 = vpop.f32.mrb[0].mxu0
        %v865 = vadd.f32 %v672, %v864
        %v866 = vpop.f32.mrb[0].mxu0
        %v867 = vadd.f32 %v674, %v866
        %v868 = vpop.f32.mrb[0].mxu0
        %v869 = vadd.f32 %v676, %v868
        %v870 = vpop.f32.mrb[0].mxu0
        %v871 = vadd.f32 %v678, %v870
        %872 = vmatprep.mubr.bf16.mxu0 0
        %873 = vmatmul.mubr.bf16.gmra.mrb[0].mxu0 %v278
        %v874 = vpop.f32.mrb[0].mxu0
        %v875 = vadd.f32 %v682, %v874
        %v876 = vpop.f32.mrb[0].mxu0
        %v877 = vadd.f32 %v684, %v876
        %v878 = vpop.f32.mrb[0].mxu0
        %v879 = vadd.f32 %v686, %v878
        %v880 = vpop.f32.mrb[0].mxu0
        %v881 = vadd.f32 %v688, %v880
        %882 = vmatprep.mubr.bf16.mxu0 0
        %883 = vmatmul.mubr.bf16.gmra.mrb[0].mxu0 %v281
        %v884 = vpop.f32.mrb[0].mxu0
        %v885 = vadd.f32 %v692, %v884
        %v886 = vpop.f32.mrb[0].mxu0
        %v887 = vadd.f32 %v694, %v886
        %v888 = vpop.f32.mrb[0].mxu0
        %v889 = vadd.f32 %v696, %v888
        %v890 = vpop.f32.mrb[0].mxu0
        %v891 = vadd.f32 %v698, %v890
        %892 = vmatprep.mubr.bf16.mxu0 0
        %893 = vmatmul.mubr.bf16.gmra.mrb[0].mxu0 %v284
        %v894 = vpop.f32.mrb[0].mxu0
        %v895 = vadd.f32 %v702, %v894
        %v896 = vpop.f32.mrb[0].mxu0
        %v897 = vadd.f32 %v704, %v896
        %v898 = vpop.f32.mrb[0].mxu0
        %v899 = vadd.f32 %v706, %v898
        %v900 = vpop.f32.mrb[0].mxu0
        %v901 = vadd.f32 %v708, %v900
        %902 = vmatprep.mubr.bf16.mxu0 0
        %903 = vmatmul.mubr.bf16.gmra.mrb[0].mxu0 %v287
        %v904 = vpop.f32.mrb[0].mxu0
        %v905 = vadd.f32 %v712, %v904
        %v906 = vpop.f32.mrb[0].mxu0
        %v907 = vadd.f32 %v714, %v906
        %v908 = vpop.f32.mrb[0].mxu0
        %v909 = vadd.f32 %v716, %v908
        %v910 = vpop.f32.mrb[0].mxu0
        %v911 = vadd.f32 %v718, %v910
        %912 = vmatprep.mubr.bf16.mxu0 0
        %913 = vmatmul.mubr.bf16.gmra.mrb[0].mxu0 %v290
        %v914 = vpop.f32.mrb[0].mxu0
        %v915 = vadd.f32 %v722, %v914
        %v916 = vpop.f32.mrb[0].mxu0
        %v917 = vadd.f32 %v724, %v916
        %v918 = vpop.f32.mrb[0].mxu0
        %v919 = vadd.f32 %v726, %v918
        %v920 = vpop.f32.mrb[0].mxu0
        %v921 = vadd.f32 %v728, %v920
        %922 = vmatprep.mubr.bf16.mxu0 0
        %923 = vmatmul.mubr.bf16.gmra.mrb[0].mxu0 %v293
        %v924 = vpop.f32.mrb[0].mxu0
        %v925 = vadd.f32 %v732, %v924
        %v926 = vpop.f32.mrb[0].mxu0
        %v927 = vadd.f32 %v734, %v926
        %v928 = vpop.f32.mrb[0].mxu0
        %v929 = vadd.f32 %v736, %v928
        %v930 = vpop.f32.mrb[0].mxu0
        %v931 = vadd.f32 %v738, %v930
        %932 = vmatprep.mubr.bf16.mxu0 0
        %933 = vmatmul.mubr.bf16.gmra.mrb[0].mxu0 %v296
        %v934 = vpop.f32.mrb[0].mxu0
        %v935 = vadd.f32 %v742, %v934
        %v936 = vpop.f32.mrb[0].mxu0
        %v937 = vadd.f32 %v744, %v936
        %v938 = vpop.f32.mrb[0].mxu0
        %v939 = vadd.f32 %v746, %v938
        %v940 = vpop.f32.mrb[0].mxu0
        %v941 = vadd.f32 %v748, %v940
        %942 = vmatprep.mubr.bf16.mxu0 0
        %943 = vmatmul.mubr.bf16.gmra.mrb[0].mxu0 %v299
        %v944 = vpop.f32.mrb[0].mxu0
        %v945 = vadd.f32 %v752, %v944
        %v946 = vpop.f32.mrb[0].mxu0
        %v947 = vadd.f32 %v754, %v946
        %v948 = vpop.f32.mrb[0].mxu0
        %v949 = vadd.f32 %v756, %v948
        %v950 = vpop.f32.mrb[0].mxu0
        %v951 = vadd.f32 %v758, %v950
        %952 = vmatprep.mubr.bf16.mxu0 0
        %953 = vmatmul.mubr.bf16.gmra.mrb[0].mxu0 %v302
        %v954 = vpop.f32.mrb[0].mxu0
        %v955 = vadd.f32 %v762, %v954
        %v956 = vpop.f32.mrb[0].mxu0
        %v957 = vadd.f32 %v764, %v956
        %v958 = vpop.f32.mrb[0].mxu0
        %v959 = vadd.f32 %v766, %v958
        %v960 = vpop.f32.mrb[0].mxu0
        %v961 = vadd.f32 %v768, %v960
        %962 = vmatprep.mubr.bf16.mxu0 0
        %963 = vmatmul.mubr.bf16.gmra.mrb[0].mxu0 %v305
        %v964 = vpop.f32.mrb[0].mxu0
        %v965 = vadd.f32 %v772, %v964
        %v966 = vpop.f32.mrb[0].mxu0
        %v967 = vadd.f32 %v774, %v966
        %v968 = vpop.f32.mrb[0].mxu0
        %v969 = vadd.f32 %v776, %v968
        %v970 = vpop.f32.mrb[0].mxu0
        %v971 = vadd.f32 %v778, %v970
        %972 = vmatprep.mubr.bf16.mxu0 0
        %973 = vmatmul.mubr.bf16.gmra.mrb[0].mxu0 %v308
        %v974 = vpop.f32.mrb[0].mxu0
        %v975 = vadd.f32 %v782, %v974
        %v976 = vpop.f32.mrb[0].mxu0
        %v977 = vadd.f32 %v784, %v976
        %v978 = vpop.f32.mrb[0].mxu0
        %v979 = vadd.f32 %v786, %v978
        %v980 = vpop.f32.mrb[0].mxu0
        %v981 = vadd.f32 %v788, %v980
        %982 = vdwg.mxu0
        %v983 = vpack.c.bf16 %v829, %v825
        %v984 = vpack.c.bf16 %v839, %v835
        %v985 = vpack.c.bf16 %v849, %v845
        %v986 = vpack.c.bf16 %v859, %v855
        %v987 = vpack.c.bf16 %v869, %v865
        %v988 = vpack.c.bf16 %v879, %v875
        %v989 = vpack.c.bf16 %v889, %v885
        %v990 = vpack.c.bf16 %v899, %v895
        %v991 = vpack.c.bf16 %v909, %v905
        %v992 = vpack.c.bf16 %v919, %v915
        %v993 = vpack.c.bf16 %v929, %v925
        %v994 = vpack.c.bf16 %v939, %v935
        %v995 = vpack.c.bf16 %v949, %v945
        %v996 = vpack.c.bf16 %v959, %v955
        %v997 = vpack.c.bf16 %v969, %v965
        %v998 = vpack.c.bf16 %v979, %v975
        %v999 = vpack.c.bf16 %v831, %v827
        %v1000 = vpack.c.bf16 %v841, %v837
        %v1001 = vpack.c.bf16 %v851, %v847
        %v1002 = vpack.c.bf16 %v861, %v857
        %v1003 = vpack.c.bf16 %v871, %v867
        %v1004 = vpack.c.bf16 %v881, %v877
        %v1005 = vpack.c.bf16 %v891, %v887
        %v1006 = vpack.c.bf16 %v901, %v897
        %v1007 = vpack.c.bf16 %v911, %v907
        %v1008 = vpack.c.bf16 %v921, %v917
        %v1009 = vpack.c.bf16 %v931, %v927
        %v1010 = vpack.c.bf16 %v941, %v937
        %v1011 = vpack.c.bf16 %v951, %v947
        %v1012 = vpack.c.bf16 %v961, %v957
        %v1013 = vpack.c.bf16 %v971, %v967
        %v1014 = vpack.c.bf16 %v981, %v977
        %1031 = vrot.lane.b32.xlu0 %v983, 64
        %v1032 = vpop.permute.xlu0 %1031
        %1033 = vrot.lane.b32.xlu0 %v984, 64
        %v1034 = vpop.permute.xlu0 %1033
        %1035 = vrot.lane.b32.xlu0 %v985, 64
        %v1036 = vpop.permute.xlu0 %1035
        %1037 = vrot.lane.b32.xlu0 %v986, 64
        %v1038 = vpop.permute.xlu0 %1037
        %1039 = vrot.lane.b32.xlu0 %v987, 64
        %v1040 = vpop.permute.xlu0 %1039
        %1041 = vrot.lane.b32.xlu0 %v988, 64
        %v1042 = vpop.permute.xlu0 %1041
        %1043 = vrot.lane.b32.xlu0 %v989, 64
        %v1044 = vpop.permute.xlu0 %1043
        %1045 = vrot.lane.b32.xlu0 %v990, 64
        %v1046 = vpop.permute.xlu0 %1045
        %1047 = vrot.lane.b32.xlu0 %v991, 64
        %v1048 = vpop.permute.xlu0 %1047
        %1049 = vrot.lane.b32.xlu0 %v992, 64
        %v1050 = vpop.permute.xlu0 %1049
        %1051 = vrot.lane.b32.xlu0 %v993, 64
        %v1052 = vpop.permute.xlu0 %1051
        %1053 = vrot.lane.b32.xlu0 %v994, 64
        %v1054 = vpop.permute.xlu0 %1053
        %1055 = vrot.lane.b32.xlu0 %v995, 64
        %v1056 = vpop.permute.xlu0 %1055
        %1057 = vrot.lane.b32.xlu0 %v996, 64
        %v1058 = vpop.permute.xlu0 %1057
        %1059 = vrot.lane.b32.xlu0 %v997, 64
        %v1060 = vpop.permute.xlu0 %1059
        %1061 = vrot.lane.b32.xlu0 %v998, 64
        %v1062 = vpop.permute.xlu0 %1061
        %vm1063 = vcmask 523264
        %v1065 = vsel %vm1063, %v983, 0
        %v1068 = vsel %vm1063, %v984, 0
        %v1071 = vsel %vm1063, %v985, 0
        %v1074 = vsel %vm1063, %v986, 0
        %v1077 = vsel %vm1063, %v987, 0
        %v1080 = vsel %vm1063, %v988, 0
        %v1083 = vsel %vm1063, %v989, 0
        %v1086 = vsel %vm1063, %v990, 0
        %v1089 = vsel %vm1063, %v991, 0
        %v1092 = vsel %vm1063, %v992, 0
        %v1095 = vsel %vm1063, %v993, 0
        %v1098 = vsel %vm1063, %v994, 0
        %v1101 = vsel %vm1063, %v995, 0
        %v1104 = vsel %vm1063, %v996, 0
        %v1107 = vsel %vm1063, %v997, 0
        %v1110 = vsel %vm1063, %v998, 0
        %v1113 = vsel %vm1063, %v1032, 0
        %v1116 = vsel %vm1063, %v1034, 0
        %v1119 = vsel %vm1063, %v1036, 0
        %v1122 = vsel %vm1063, %v1038, 0
        %v1125 = vsel %vm1063, %v1040, 0
        %v1128 = vsel %vm1063, %v1042, 0
        %v1131 = vsel %vm1063, %v1044, 0
        %v1134 = vsel %vm1063, %v1046, 0
        %v1137 = vsel %vm1063, %v1048, 0
        %v1140 = vsel %vm1063, %v1050, 0
        %v1143 = vsel %vm1063, %v1052, 0
        %v1146 = vsel %vm1063, %v1054, 0
        %v1149 = vsel %vm1063, %v1056, 0
        %v1152 = vsel %vm1063, %v1058, 0
        %v1155 = vsel %vm1063, %v1060, 0
        %v1158 = vsel %vm1063, %v1062, 0
        %1160 = vmatprep.subr.bf16.mxu0 0
        %1161 = vmatpush1.bf16.xpose.msra.mxu0 %v1113
        %1162 = vmatprep.subr.bf16.mxu0 0
        %1163 = vmatpush1.bf16.xpose.msra.mxu0 %v1116
        %1164 = vmatprep.subr.bf16.mxu0 0
        %1165 = vmatpush1.bf16.xpose.msra.mxu0 %v1119
        %1166 = vmatprep.subr.bf16.mxu0 0
        %1167 = vmatpush1.bf16.xpose.msra.mxu0 %v1122
        %1168 = vmatprep.subr.bf16.mxu0 0
        %1169 = vmatpush1.bf16.xpose.msra.mxu0 %v1125
        %1170 = vmatprep.subr.bf16.mxu0 0
        %1171 = vmatpush1.bf16.xpose.msra.mxu0 %v1128
        %1172 = vmatprep.subr.bf16.mxu0 0
        %1173 = vmatpush1.bf16.xpose.msra.mxu0 %v1131
        %1174 = vmatprep.subr.bf16.mxu0 0
        %1175 = vmatpush1.bf16.xpose.msra.mxu0 %v1134
        %1176 = vmatprep.subr.bf16.mxu0 0
        %1177 = vmatpush1.bf16.xpose.msra.mxu0 %v1137
        %1178 = vmatprep.subr.bf16.mxu0 0
        %1179 = vmatpush1.bf16.xpose.msra.mxu0 %v1140
        %1180 = vmatprep.subr.bf16.mxu0 0
        %1181 = vmatpush1.bf16.xpose.msra.mxu0 %v1143
        %1182 = vmatprep.subr.bf16.mxu0 0
        %1183 = vmatpush1.bf16.xpose.msra.mxu0 %v1146
        %1184 = vmatprep.subr.bf16.mxu0 0
        %1185 = vmatpush1.bf16.xpose.msra.mxu0 %v1149
        %1186 = vmatprep.subr.bf16.mxu0 0
        %1187 = vmatpush1.bf16.xpose.msra.mxu0 %v1152
        %1188 = vmatprep.subr.bf16.mxu0 0
        %1189 = vmatpush1.bf16.xpose.msra.mxu0 %v1155
        %1190 = vmatprep.subr.bf16.mxu0 0
        %1191 = vmatpush1.bf16.xpose.msra.mxu0 %v1158
        %1192 = vmatprep.mubr.bf16.mxu0 0
        %1193 = vmatmul.mubr.bf16.gmra.mrb[0].mxu0 %v1065
        %v1194 = vpop.f32.mrb[0].mxu0
        %v1195 = vadd.f32 0.0, %v1194
        %v1196 = vpop.f32.mrb[0].mxu0
        %v1197 = vadd.f32 0.0, %v1196
        %v1198 = vpop.f32.mrb[0].mxu0
        %v1199 = vadd.f32 0.0, %v1198
        %v1200 = vpop.f32.mrb[0].mxu0
        %v1201 = vadd.f32 0.0, %v1200
        %1202 = vmatprep.mubr.bf16.mxu0 0
        %1203 = vmatmul.mubr.bf16.gmra.mrb[0].mxu0 %v1068
        %v1204 = vpop.f32.mrb[0].mxu0
        %v1205 = vadd.f32 0.0, %v1204
        %v1206 = vpop.f32.mrb[0].mxu0
        %v1207 = vadd.f32 0.0, %v1206
        %v1208 = vpop.f32.mrb[0].mxu0
        %v1209 = vadd.f32 0.0, %v1208
        %v1210 = vpop.f32.mrb[0].mxu0
        %v1211 = vadd.f32 0.0, %v1210
        %1212 = vmatprep.mubr.bf16.mxu0 0
        %1213 = vmatmul.mubr.bf16.gmra.mrb[0].mxu0 %v1071
        %v1214 = vpop.f32.mrb[0].mxu0
        %v1215 = vadd.f32 0.0, %v1214
        %v1216 = vpop.f32.mrb[0].mxu0
        %v1217 = vadd.f32 0.0, %v1216
        %v1218 = vpop.f32.mrb[0].mxu0
        %v1219 = vadd.f32 0.0, %v1218
        %v1220 = vpop.f32.mrb[0].mxu0
        %v1221 = vadd.f32 0.0, %v1220
        %1222 = vmatprep.mubr.bf16.mxu0 0
        %1223 = vmatmul.mubr.bf16.gmra.mrb[0].mxu0 %v1074
        %v1224 = vpop.f32.mrb[0].mxu0
        %v1225 = vadd.f32 0.0, %v1224
        %v1226 = vpop.f32.mrb[0].mxu0
        %v1227 = vadd.f32 0.0, %v1226
        %v1228 = vpop.f32.mrb[0].mxu0
        %v1229 = vadd.f32 0.0, %v1228
        %v1230 = vpop.f32.mrb[0].mxu0
        %v1231 = vadd.f32 0.0, %v1230
        %1232 = vmatprep.mubr.bf16.mxu0 0
        %1233 = vmatmul.mubr.bf16.gmra.mrb[0].mxu0 %v1077
        %v1234 = vpop.f32.mrb[0].mxu0
        %v1235 = vadd.f32 0.0, %v1234
        %v1236 = vpop.f32.mrb[0].mxu0
        %v1237 = vadd.f32 0.0, %v1236
        %v1238 = vpop.f32.mrb[0].mxu0
        %v1239 = vadd.f32 0.0, %v1238
        %v1240 = vpop.f32.mrb[0].mxu0
        %v1241 = vadd.f32 0.0, %v1240
        %1242 = vmatprep.mubr.bf16.mxu0 0
        %1243 = vmatmul.mubr.bf16.gmra.mrb[0].mxu0 %v1080
        %v1244 = vpop.f32.mrb[0].mxu0
        %v1245 = vadd.f32 0.0, %v1244
        %v1246 = vpop.f32.mrb[0].mxu0
        %v1247 = vadd.f32 0.0, %v1246
        %v1248 = vpop.f32.mrb[0].mxu0
        %v1249 = vadd.f32 0.0, %v1248
        %v1250 = vpop.f32.mrb[0].mxu0
        %v1251 = vadd.f32 0.0, %v1250
        %1252 = vmatprep.mubr.bf16.mxu0 0
        %1253 = vmatmul.mubr.bf16.gmra.mrb[0].mxu0 %v1083
        %v1254 = vpop.f32.mrb[0].mxu0
        %v1255 = vadd.f32 0.0, %v1254
        %v1256 = vpop.f32.mrb[0].mxu0
        %v1257 = vadd.f32 0.0, %v1256
        %v1258 = vpop.f32.mrb[0].mxu0
        %v1259 = vadd.f32 0.0, %v1258
        %v1260 = vpop.f32.mrb[0].mxu0
        %v1261 = vadd.f32 0.0, %v1260
        %1262 = vmatprep.mubr.bf16.mxu0 0
        %1263 = vmatmul.mubr.bf16.gmra.mrb[0].mxu0 %v1086
        %v1264 = vpop.f32.mrb[0].mxu0
        %v1265 = vadd.f32 0.0, %v1264
        %v1266 = vpop.f32.mrb[0].mxu0
        %v1267 = vadd.f32 0.0, %v1266
        %v1268 = vpop.f32.mrb[0].mxu0
        %v1269 = vadd.f32 0.0, %v1268
        %v1270 = vpop.f32.mrb[0].mxu0
        %v1271 = vadd.f32 0.0, %v1270
        %1272 = vmatprep.mubr.bf16.mxu0 0
        %1273 = vmatmul.mubr.bf16.gmra.mrb[0].mxu0 %v1089
        %v1274 = vpop.f32.mrb[0].mxu0
        %v1275 = vadd.f32 0.0, %v1274
        %v1276 = vpop.f32.mrb[0].mxu0
        %v1277 = vadd.f32 0.0, %v1276
        %v1278 = vpop.f32.mrb[0].mxu0
        %v1279 = vadd.f32 0.0, %v1278
        %v1280 = vpop.f32.mrb[0].mxu0
        %v1281 = vadd.f32 0.0, %v1280
        %1282 = vmatprep.mubr.bf16.mxu0 0
        %1283 = vmatmul.mubr.bf16.gmra.mrb[0].mxu0 %v1092
        %v1284 = vpop.f32.mrb[0].mxu0
        %v1285 = vadd.f32 0.0, %v1284
        %v1286 = vpop.f32.mrb[0].mxu0
        %v1287 = vadd.f32 0.0, %v1286
        %v1288 = vpop.f32.mrb[0].mxu0
        %v1289 = vadd.f32 0.0, %v1288
        %v1290 = vpop.f32.mrb[0].mxu0
        %v1291 = vadd.f32 0.0, %v1290
        %1292 = vmatprep.mubr.bf16.mxu0 0
        %1293 = vmatmul.mubr.bf16.gmra.mrb[0].mxu0 %v1095
        %v1294 = vpop.f32.mrb[0].mxu0
        %v1295 = vadd.f32 0.0, %v1294
        %v1296 = vpop.f32.mrb[0].mxu0
        %v1297 = vadd.f32 0.0, %v1296
        %v1298 = vpop.f32.mrb[0].mxu0
        %v1299 = vadd.f32 0.0, %v1298
        %v1300 = vpop.f32.mrb[0].mxu0
        %v1301 = vadd.f32 0.0, %v1300
        %1302 = vmatprep.mubr.bf16.mxu0 0
        %1303 = vmatmul.mubr.bf16.gmra.mrb[0].mxu0 %v1098
        %v1304 = vpop.f32.mrb[0].mxu0
        %v1305 = vadd.f32 0.0, %v1304
        %v1306 = vpop.f32.mrb[0].mxu0
        %v1307 = vadd.f32 0.0, %v1306
        %v1308 = vpop.f32.mrb[0].mxu0
        %v1309 = vadd.f32 0.0, %v1308
        %v1310 = vpop.f32.mrb[0].mxu0
        %v1311 = vadd.f32 0.0, %v1310
        %1312 = vmatprep.mubr.bf16.mxu0 0
        %1313 = vmatmul.mubr.bf16.gmra.mrb[0].mxu0 %v1101
        %v1314 = vpop.f32.mrb[0].mxu0
        %v1315 = vadd.f32 0.0, %v1314
        %v1316 = vpop.f32.mrb[0].mxu0
        %v1317 = vadd.f32 0.0, %v1316
        %v1318 = vpop.f32.mrb[0].mxu0
        %v1319 = vadd.f32 0.0, %v1318
        %v1320 = vpop.f32.mrb[0].mxu0
        %v1321 = vadd.f32 0.0, %v1320
        %1322 = vmatprep.mubr.bf16.mxu0 0
        %1323 = vmatmul.mubr.bf16.gmra.mrb[0].mxu0 %v1104
        %v1324 = vpop.f32.mrb[0].mxu0
        %v1325 = vadd.f32 0.0, %v1324
        %v1326 = vpop.f32.mrb[0].mxu0
        %v1327 = vadd.f32 0.0, %v1326
        %v1328 = vpop.f32.mrb[0].mxu0
        %v1329 = vadd.f32 0.0, %v1328
        %v1330 = vpop.f32.mrb[0].mxu0
        %v1331 = vadd.f32 0.0, %v1330
        %1332 = vmatprep.mubr.bf16.mxu0 0
        %1333 = vmatmul.mubr.bf16.gmra.mrb[0].mxu0 %v1107
        %v1334 = vpop.f32.mrb[0].mxu0
        %v1335 = vadd.f32 0.0, %v1334
        %v1336 = vpop.f32.mrb[0].mxu0
        %v1337 = vadd.f32 0.0, %v1336
        %v1338 = vpop.f32.mrb[0].mxu0
        %v1339 = vadd.f32 0.0, %v1338
        %v1340 = vpop.f32.mrb[0].mxu0
        %v1341 = vadd.f32 0.0, %v1340
        %1342 = vmatprep.mubr.bf16.mxu0 0
        %1343 = vmatmul.mubr.bf16.gmra.mrb[0].mxu0 %v1110
        %v1344 = vpop.f32.mrb[0].mxu0
        %v1345 = vadd.f32 0.0, %v1344
        %v1346 = vpop.f32.mrb[0].mxu0
        %v1347 = vadd.f32 0.0, %v1346
        %v1348 = vpop.f32.mrb[0].mxu0
        %v1349 = vadd.f32 0.0, %v1348
        %v1350 = vpop.f32.mrb[0].mxu0
        %v1351 = vadd.f32 0.0, %v1350
        %1352 = vdwg.mxu0
        %v1353 = vlaneseq
        %v1354 = vshrl.u32 %v1353, 7
        %v1355 = vadd.s32 %v1354, 8
        %v1356 = vadd.s32 %v1354, 16
        %v1357 = vadd.s32 %v1354, 24
        %v1358 = vadd.s32 %v1354, 32
        %v1359 = vadd.s32 %v1354, 40
        %v1360 = vadd.s32 %v1354, 48
        %v1361 = vadd.s32 %v1354, 56
        %v1362 = vadd.s32 %v1354, 64
        %v1363 = vadd.s32 %v1354, 72
        %v1364 = vadd.s32 %v1354, 80
        %v1365 = vadd.s32 %v1354, 88
        %v1366 = vadd.s32 %v1354, 96
        %v1367 = vadd.s32 %v1354, 104
        %v1368 = vadd.s32 %v1354, 112
        %v1369 = vadd.s32 %v1354, 120
        %v1370 = vadd.s32 %v1354, 128
        %v1371 = vadd.s32 %v1354, 136
        %v1372 = vadd.s32 %v1354, 144
        %v1373 = vadd.s32 %v1354, 152
        %v1374 = vadd.s32 %v1354, 160
        %v1375 = vadd.s32 %v1354, 168
        %v1376 = vadd.s32 %v1354, 176
        %v1377 = vadd.s32 %v1354, 184
        %v1378 = vadd.s32 %v1354, 192
        %v1379 = vadd.s32 %v1354, 200
        %v1380 = vadd.s32 %v1354, 208
        %v1381 = vadd.s32 %v1354, 216
        %v1382 = vadd.s32 %v1354, 224
        %v1383 = vadd.s32 %v1354, 232
        %v1384 = vadd.s32 %v1354, 240
        %v1385 = vadd.s32 %v1354, 248
        %v1386 = vlaneseq
        %v1387 = vand.u32 %v1386, 127
        %v1388 = vadd.s32 %v1387, 128
        %vm1389 = vcmp.ge.s32.totalorder %v1354, %v1387
        %vm1390 = vcmp.ge.s32.totalorder %v1354, %v1388
        %vm1391 = vcmp.ge.s32.totalorder %v1355, %v1387
        %vm1392 = vcmp.ge.s32.totalorder %v1355, %v1388
        %vm1393 = vcmp.ge.s32.totalorder %v1356, %v1387
        %vm1394 = vcmp.ge.s32.totalorder %v1356, %v1388
        %vm1395 = vcmp.ge.s32.totalorder %v1357, %v1387
        %vm1396 = vcmp.ge.s32.totalorder %v1357, %v1388
        %vm1397 = vcmp.ge.s32.totalorder %v1358, %v1387
        %vm1398 = vcmp.ge.s32.totalorder %v1358, %v1388
        %vm1399 = vcmp.ge.s32.totalorder %v1359, %v1387
        %vm1400 = vcmp.ge.s32.totalorder %v1359, %v1388
        %vm1401 = vcmp.ge.s32.totalorder %v1360, %v1387
        %vm1402 = vcmp.ge.s32.totalorder %v1360, %v1388
        %vm1403 = vcmp.ge.s32.totalorder %v1361, %v1387
        %vm1404 = vcmp.ge.s32.totalorder %v1361, %v1388
        %vm1405 = vcmp.ge.s32.totalorder %v1362, %v1387
        %vm1406 = vcmp.ge.s32.totalorder %v1362, %v1388
        %vm1407 = vcmp.ge.s32.totalorder %v1363, %v1387
        %vm1408 = vcmp.ge.s32.totalorder %v1363, %v1388
        %vm1409 = vcmp.ge.s32.totalorder %v1364, %v1387
        %vm1410 = vcmp.ge.s32.totalorder %v1364, %v1388
        %vm1411 = vcmp.ge.s32.totalorder %v1365, %v1387
        %vm1412 = vcmp.ge.s32.totalorder %v1365, %v1388
        %vm1413 = vcmp.ge.s32.totalorder %v1366, %v1387
        %vm1414 = vcmp.ge.s32.totalorder %v1366, %v1388
        %vm1415 = vcmp.ge.s32.totalorder %v1367, %v1387
        %vm1416 = vcmp.ge.s32.totalorder %v1367, %v1388
        %vm1417 = vcmp.ge.s32.totalorder %v1368, %v1387
        %vm1418 = vcmp.ge.s32.totalorder %v1368, %v1388
        %vm1419 = vcmp.ge.s32.totalorder %v1369, %v1387
        %vm1420 = vcmp.ge.s32.totalorder %v1369, %v1388
        %vm1421 = vcmp.ge.s32.totalorder %v1370, %v1387
        %vm1422 = vcmp.ge.s32.totalorder %v1370, %v1388
        %vm1423 = vcmp.ge.s32.totalorder %v1371, %v1387
        %vm1424 = vcmp.ge.s32.totalorder %v1371, %v1388
        %vm1425 = vcmp.ge.s32.totalorder %v1372, %v1387
        %vm1426 = vcmp.ge.s32.totalorder %v1372, %v1388
        %vm1427 = vcmp.ge.s32.totalorder %v1373, %v1387
        %vm1428 = vcmp.ge.s32.totalorder %v1373, %v1388
        %vm1429 = vcmp.ge.s32.totalorder %v1374, %v1387
        %vm1430 = vcmp.ge.s32.totalorder %v1374, %v1388
        %vm1431 = vcmp.ge.s32.totalorder %v1375, %v1387
        %vm1432 = vcmp.ge.s32.totalorder %v1375, %v1388
        %vm1433 = vcmp.ge.s32.totalorder %v1376, %v1387
        %vm1434 = vcmp.ge.s32.totalorder %v1376, %v1388
        %vm1435 = vcmp.ge.s32.totalorder %v1377, %v1387
        %vm1436 = vcmp.ge.s32.totalorder %v1377, %v1388
        %vm1437 = vcmp.ge.s32.totalorder %v1378, %v1387
        %vm1438 = vcmp.ge.s32.totalorder %v1378, %v1388
        %vm1439 = vcmp.ge.s32.totalorder %v1379, %v1387
        %vm1440 = vcmp.ge.s32.totalorder %v1379, %v1388
        %vm1441 = vcmp.ge.s32.totalorder %v1380, %v1387
        %vm1442 = vcmp.ge.s32.totalorder %v1380, %v1388
        %vm1443 = vcmp.ge.s32.totalorder %v1381, %v1387
        %vm1444 = vcmp.ge.s32.totalorder %v1381, %v1388
        %vm1445 = vcmp.ge.s32.totalorder %v1382, %v1387
        %vm1446 = vcmp.ge.s32.totalorder %v1382, %v1388
        %vm1447 = vcmp.ge.s32.totalorder %v1383, %v1387
        %vm1448 = vcmp.ge.s32.totalorder %v1383, %v1388
        %vm1449 = vcmp.ge.s32.totalorder %v1384, %v1387
        %vm1450 = vcmp.ge.s32.totalorder %v1384, %v1388
        %vm1451 = vcmp.ge.s32.totalorder %v1385, %v1387
        %vm1452 = vcmp.ge.s32.totalorder %v1385, %v1388
        %v1453 = vsel %vm1389, %v1195, -inf
        %v1454 = vsel %vm1390, %v1197, -inf
        %v1455 = vsel %vm1391, %v1199, -inf
        %v1456 = vsel %vm1392, %v1201, -inf
        %v1457 = vsel %vm1393, %v1205, -inf
        %v1458 = vsel %vm1394, %v1207, -inf
        %v1459 = vsel %vm1395, %v1209, -inf
        %v1460 = vsel %vm1396, %v1211, -inf
        %v1461 = vsel %vm1397, %v1215, -inf
        %v1462 = vsel %vm1398, %v1217, -inf
        %v1463 = vsel %vm1399, %v1219, -inf
        %v1464 = vsel %vm1400, %v1221, -inf
        %v1465 = vsel %vm1401, %v1225, -inf
        %v1466 = vsel %vm1402, %v1227, -inf
        %v1467 = vsel %vm1403, %v1229, -inf
        %v1468 = vsel %vm1404, %v1231, -inf
        %v1469 = vsel %vm1405, %v1235, -inf
        %v1470 = vsel %vm1406, %v1237, -inf
        %v1471 = vsel %vm1407, %v1239, -inf
        %v1472 = vsel %vm1408, %v1241, -inf
        %v1473 = vsel %vm1409, %v1245, -inf
        %v1474 = vsel %vm1410, %v1247, -inf
        %v1475 = vsel %vm1411, %v1249, -inf
        %v1476 = vsel %vm1412, %v1251, -inf
        %v1477 = vsel %vm1413, %v1255, -inf
        %v1478 = vsel %vm1414, %v1257, -inf
        %v1479 = vsel %vm1415, %v1259, -inf
        %v1480 = vsel %vm1416, %v1261, -inf
        %v1481 = vsel %vm1417, %v1265, -inf
        %v1482 = vsel %vm1418, %v1267, -inf
        %v1483 = vsel %vm1419, %v1269, -inf
        %v1484 = vsel %vm1420, %v1271, -inf
        %v1485 = vsel %vm1421, %v1275, -inf
        %v1486 = vsel %vm1422, %v1277, -inf
        %v1487 = vsel %vm1423, %v1279, -inf
        %v1488 = vsel %vm1424, %v1281, -inf
        %v1489 = vsel %vm1425, %v1285, -inf
        %v1490 = vsel %vm1426, %v1287, -inf
        %v1491 = vsel %vm1427, %v1289, -inf
        %v1492 = vsel %vm1428, %v1291, -inf
        %v1493 = vsel %vm1429, %v1295, -inf
        %v1494 = vsel %vm1430, %v1297, -inf
        %v1495 = vsel %vm1431, %v1299, -inf
        %v1496 = vsel %vm1432, %v1301, -inf
        %v1497 = vsel %vm1433, %v1305, -inf
        %v1498 = vsel %vm1434, %v1307, -inf
        %v1499 = vsel %vm1435, %v1309, -inf
        %v1500 = vsel %vm1436, %v1311, -inf
        %v1501 = vsel %vm1437, %v1315, -inf
        %v1502 = vsel %vm1438, %v1317, -inf
        %v1503 = vsel %vm1439, %v1319, -inf
        %v1504 = vsel %vm1440, %v1321, -inf
        %v1505 = vsel %vm1441, %v1325, -inf
        %v1506 = vsel %vm1442, %v1327, -inf
        %v1507 = vsel %vm1443, %v1329, -inf
        %v1508 = vsel %vm1444, %v1331, -inf
        %v1509 = vsel %vm1445, %v1335, -inf
        %v1510 = vsel %vm1446, %v1337, -inf
        %v1511 = vsel %vm1447, %v1339, -inf
        %v1512 = vsel %vm1448, %v1341, -inf
        %v1513 = vsel %vm1449, %v1345, -inf
        %v1514 = vsel %vm1450, %v1347, -inf
        %v1515 = vsel %vm1451, %v1349, -inf
        %v1516 = vsel %vm1452, %v1351, -inf
        %v1517 = vmax.f32 %v1453, %v1454
        %1518 = vmax.xlane.f32.xlu0 %v1517
        %v1519 = vpop.xlane.xlu0 %1518
        %v1520 = vmax.f32 %v1455, %v1456
        %1521 = vmax.xlane.f32.xlu0 %v1520
        %v1522 = vpop.xlane.xlu0 %1521
        %v1523 = vmax.f32 %v1457, %v1458
        %1524 = vmax.xlane.f32.xlu0 %v1523
        %v1525 = vpop.xlane.xlu0 %1524
        %v1526 = vmax.f32 %v1459, %v1460
        %1527 = vmax.xlane.f32.xlu0 %v1526
        %v1528 = vpop.xlane.xlu0 %1527
        %v1529 = vmax.f32 %v1461, %v1462
        %1530 = vmax.xlane.f32.xlu0 %v1529
        %v1531 = vpop.xlane.xlu0 %1530
        %v1532 = vmax.f32 %v1463, %v1464
        %1533 = vmax.xlane.f32.xlu0 %v1532
        %v1534 = vpop.xlane.xlu0 %1533
        %v1535 = vmax.f32 %v1465, %v1466
        %1536 = vmax.xlane.f32.xlu0 %v1535
        %v1537 = vpop.xlane.xlu0 %1536
        %v1538 = vmax.f32 %v1467, %v1468
        %1539 = vmax.xlane.f32.xlu0 %v1538
        %v1540 = vpop.xlane.xlu0 %1539
        %v1541 = vmax.f32 %v1469, %v1470
        %1542 = vmax.xlane.f32.xlu0 %v1541
        %v1543 = vpop.xlane.xlu0 %1542
        %v1544 = vmax.f32 %v1471, %v1472
        %1545 = vmax.xlane.f32.xlu0 %v1544
        %v1546 = vpop.xlane.xlu0 %1545
        %v1547 = vmax.f32 %v1473, %v1474
        %1548 = vmax.xlane.f32.xlu0 %v1547
        %v1549 = vpop.xlane.xlu0 %1548
        %v1550 = vmax.f32 %v1475, %v1476
        %1551 = vmax.xlane.f32.xlu0 %v1550
        %v1552 = vpop.xlane.xlu0 %1551
        %v1553 = vmax.f32 %v1477, %v1478
        %1554 = vmax.xlane.f32.xlu0 %v1553
        %v1555 = vpop.xlane.xlu0 %1554
        %v1556 = vmax.f32 %v1479, %v1480
        %1557 = vmax.xlane.f32.xlu0 %v1556
        %v1558 = vpop.xlane.xlu0 %1557
        %v1559 = vmax.f32 %v1481, %v1482
        %1560 = vmax.xlane.f32.xlu0 %v1559
        %v1561 = vpop.xlane.xlu0 %1560
        %v1562 = vmax.f32 %v1483, %v1484
        %1563 = vmax.xlane.f32.xlu0 %v1562
        %v1564 = vpop.xlane.xlu0 %1563
        %v1565 = vmax.f32 %v1485, %v1486
        %1566 = vmax.xlane.f32.xlu0 %v1565
        %v1567 = vpop.xlane.xlu0 %1566
        %v1568 = vmax.f32 %v1487, %v1488
        %1569 = vmax.xlane.f32.xlu0 %v1568
        %v1570 = vpop.xlane.xlu0 %1569
        %v1571 = vmax.f32 %v1489, %v1490
        %1572 = vmax.xlane.f32.xlu0 %v1571
        %v1573 = vpop.xlane.xlu0 %1572
        %v1574 = vmax.f32 %v1491, %v1492
        %1575 = vmax.xlane.f32.xlu0 %v1574
        %v1576 = vpop.xlane.xlu0 %1575
        %v1577 = vmax.f32 %v1493, %v1494
        %1578 = vmax.xlane.f32.xlu0 %v1577
        %v1579 = vpop.xlane.xlu0 %1578
        %v1580 = vmax.f32 %v1495, %v1496
        %1581 = vmax.xlane.f32.xlu0 %v1580
        %v1582 = vpop.xlane.xlu0 %1581
        %v1583 = vmax.f32 %v1497, %v1498
        %1584 = vmax.xlane.f32.xlu0 %v1583
        %v1585 = vpop.xlane.xlu0 %1584
        %v1586 = vmax.f32 %v1499, %v1500
        %1587 = vmax.xlane.f32.xlu0 %v1586
        %v1588 = vpop.xlane.xlu0 %1587
        %v1589 = vmax.f32 %v1501, %v1502
        %1590 = vmax.xlane.f32.xlu0 %v1589
        %v1591 = vpop.xlane.xlu0 %1590
        %v1592 = vmax.f32 %v1503, %v1504
        %1593 = vmax.xlane.f32.xlu0 %v1592
        %v1594 = vpop.xlane.xlu0 %1593
        %v1595 = vmax.f32 %v1505, %v1506
        %1596 = vmax.xlane.f32.xlu0 %v1595
        %v1597 = vpop.xlane.xlu0 %1596
        %v1598 = vmax.f32 %v1507, %v1508
        %1599 = vmax.xlane.f32.xlu0 %v1598
        %v1600 = vpop.xlane.xlu0 %1599
        %v1601 = vmax.f32 %v1509, %v1510
        %1602 = vmax.xlane.f32.xlu0 %v1601
        %v1603 = vpop.xlane.xlu0 %1602
        %v1604 = vmax.f32 %v1511, %v1512
        %1605 = vmax.xlane.f32.xlu0 %v1604
        %v1606 = vpop.xlane.xlu0 %1605
        %v1607 = vmax.f32 %v1513, %v1514
        %1608 = vmax.xlane.f32.xlu0 %v1607
        %v1609 = vpop.xlane.xlu0 %1608
        %v1610 = vmax.f32 %v1515, %v1516
        %1611 = vmax.xlane.f32.xlu0 %v1610
        %v1612 = vpop.xlane.xlu0 %1611
        %v1613 = vsub.f32 %v1453, %v1519
        %v1614 = vsub.f32 %v1454, %v1519
        %v1615 = vsub.f32 %v1455, %v1522
        %v1616 = vsub.f32 %v1456, %v1522
        %v1617 = vsub.f32 %v1457, %v1525
        %v1618 = vsub.f32 %v1458, %v1525
        %v1619 = vsub.f32 %v1459, %v1528
        %v1620 = vsub.f32 %v1460, %v1528
        %v1621 = vsub.f32 %v1461, %v1531
        %v1622 = vsub.f32 %v1462, %v1531
        %v1623 = vsub.f32 %v1463, %v1534
        %v1624 = vsub.f32 %v1464, %v1534
        %v1625 = vsub.f32 %v1465, %v1537
        %v1626 = vsub.f32 %v1466, %v1537
        %v1627 = vsub.f32 %v1467, %v1540
        %v1628 = vsub.f32 %v1468, %v1540
        %v1629 = vsub.f32 %v1469, %v1543
        %v1630 = vsub.f32 %v1470, %v1543
        %v1631 = vsub.f32 %v1471, %v1546
        %v1632 = vsub.f32 %v1472, %v1546
        %v1633 = vsub.f32 %v1473, %v1549
        %v1634 = vsub.f32 %v1474, %v1549
        %v1635 = vsub.f32 %v1475, %v1552
        %v1636 = vsub.f32 %v1476, %v1552
        %v1637 = vsub.f32 %v1477, %v1555
        %v1638 = vsub.f32 %v1478, %v1555
        %v1639 = vsub.f32 %v1479, %v1558
        %v1640 = vsub.f32 %v1480, %v1558
        %v1641 = vsub.f32 %v1481, %v1561
        %v1642 = vsub.f32 %v1482, %v1561
        %v1643 = vsub.f32 %v1483, %v1564
        %v1644 = vsub.f32 %v1484, %v1564
        %v1645 = vsub.f32 %v1485, %v1567
        %v1646 = vsub.f32 %v1486, %v1567
        %v1647 = vsub.f32 %v1487, %v1570
        %v1648 = vsub.f32 %v1488, %v1570
        %v1649 = vsub.f32 %v1489, %v1573
        %v1650 = vsub.f32 %v1490, %v1573
        %v1651 = vsub.f32 %v1491, %v1576
        %v1652 = vsub.f32 %v1492, %v1576
        %v1653 = vsub.f32 %v1493, %v1579
        %v1654 = vsub.f32 %v1494, %v1579
        %v1655 = vsub.f32 %v1495, %v1582
        %v1656 = vsub.f32 %v1496, %v1582
        %v1657 = vsub.f32 %v1497, %v1585
        %v1658 = vsub.f32 %v1498, %v1585
        %v1659 = vsub.f32 %v1499, %v1588
        %v1660 = vsub.f32 %v1500, %v1588
        %v1661 = vsub.f32 %v1501, %v1591
        %v1662 = vsub.f32 %v1502, %v1591
        %v1663 = vsub.f32 %v1503, %v1594
        %v1664 = vsub.f32 %v1504, %v1594
        %v1665 = vsub.f32 %v1505, %v1597
        %v1666 = vsub.f32 %v1506, %v1597
        %v1667 = vsub.f32 %v1507, %v1600
        %v1668 = vsub.f32 %v1508, %v1600
        %v1669 = vsub.f32 %v1509, %v1603
        %v1670 = vsub.f32 %v1510, %v1603
        %v1671 = vsub.f32 %v1511, %v1606
        %v1672 = vsub.f32 %v1512, %v1606
        %v1673 = vsub.f32 %v1513, %v1609
        %v1674 = vsub.f32 %v1514, %v1609
        %v1675 = vsub.f32 %v1515, %v1612
        %v1676 = vsub.f32 %v1516, %v1612
        %v1677 = vmul.f32 %v1613, 1.442695
        %v1678 = vpow.pop %v1677
        %v1679 = vmul.f32 %v1614, 1.442695
        %v1680 = vpow.pop %v1679
        %v1681 = vmul.f32 %v1615, 1.442695
        %v1682 = vpow.pop %v1681
        %v1683 = vmul.f32 %v1616, 1.442695
        %v1684 = vpow.pop %v1683
        %v1685 = vmul.f32 %v1617, 1.442695
        %v1686 = vpow.pop %v1685
        %v1687 = vmul.f32 %v1618, 1.442695
        %v1688 = vpow.pop %v1687
        %v1689 = vmul.f32 %v1619, 1.442695
        %v1690 = vpow.pop %v1689
        %v1691 = vmul.f32 %v1620, 1.442695
        %v1692 = vpow.pop %v1691
        %v1693 = vmul.f32 %v1621, 1.442695
        %v1694 = vpow.pop %v1693
        %v1695 = vmul.f32 %v1622, 1.442695
        %v1696 = vpow.pop %v1695
        %v1697 = vmul.f32 %v1623, 1.442695
        %v1698 = vpow.pop %v1697
        %v1699 = vmul.f32 %v1624, 1.442695
        %v1700 = vpow.pop %v1699
        %v1701 = vmul.f32 %v1625, 1.442695
        %v1702 = vpow.pop %v1701
        %v1703 = vmul.f32 %v1626, 1.442695
        %v1704 = vpow.pop %v1703
        %v1705 = vmul.f32 %v1627, 1.442695
        %v1706 = vpow.pop %v1705
        %v1707 = vmul.f32 %v1628, 1.442695
        %v1708 = vpow.pop %v1707
        %v1709 = vmul.f32 %v1629, 1.442695
        %v1710 = vpow.pop %v1709
        %v1711 = vmul.f32 %v1630, 1.442695
        %v1712 = vpow.pop %v1711
        %v1713 = vmul.f32 %v1631, 1.442695
        %v1714 = vpow.pop %v1713
        %v1715 = vmul.f32 %v1632, 1.442695
        %v1716 = vpow.pop %v1715
        %v1717 = vmul.f32 %v1633, 1.442695
        %v1718 = vpow.pop %v1717
        %v1719 = vmul.f32 %v1634, 1.442695
        %v1720 = vpow.pop %v1719
        %v1721 = vmul.f32 %v1635, 1.442695
        %v1722 = vpow.pop %v1721
        %v1723 = vmul.f32 %v1636, 1.442695
        %v1724 = vpow.pop %v1723
        %v1725 = vmul.f32 %v1637, 1.442695
        %v1726 = vpow.pop %v1725
        %v1727 = vmul.f32 %v1638, 1.442695
        %v1728 = vpow.pop %v1727
        %v1729 = vmul.f32 %v1639, 1.442695
        %v1730 = vpow.pop %v1729
        %v1731 = vmul.f32 %v1640, 1.442695
        %v1732 = vpow.pop %v1731
        %v1733 = vmul.f32 %v1641, 1.442695
        %v1734 = vpow.pop %v1733
        %v1735 = vmul.f32 %v1642, 1.442695
        %v1736 = vpow.pop %v1735
        %v1737 = vmul.f32 %v1643, 1.442695
        %v1738 = vpow.pop %v1737
        %v1739 = vmul.f32 %v1644, 1.442695
        %v1740 = vpow.pop %v1739
        %v1741 = vmul.f32 %v1645, 1.442695
        %v1742 = vpow.pop %v1741
        %v1743 = vmul.f32 %v1646, 1.442695
        %v1744 = vpow.pop %v1743
        %v1745 = vmul.f32 %v1647, 1.442695
        %v1746 = vpow.pop %v1745
        %v1747 = vmul.f32 %v1648, 1.442695
        %v1748 = vpow.pop %v1747
        %v1749 = vmul.f32 %v1649, 1.442695
        %v1750 = vpow.pop %v1749
        %v1751 = vmul.f32 %v1650, 1.442695
        %v1752 = vpow.pop %v1751
        %v1753 = vmul.f32 %v1651, 1.442695
        %v1754 = vpow.pop %v1753
        %v1755 = vmul.f32 %v1652, 1.442695
        %v1756 = vpow.pop %v1755
        %v1757 = vmul.f32 %v1653, 1.442695
        %v1758 = vpow.pop %v1757
        %v1759 = vmul.f32 %v1654, 1.442695
        %v1760 = vpow.pop %v1759
        %v1761 = vmul.f32 %v1655, 1.442695
        %v1762 = vpow.pop %v1761
        %v1763 = vmul.f32 %v1656, 1.442695
        %v1764 = vpow.pop %v1763
        %v1765 = vmul.f32 %v1657, 1.442695
        %v1766 = vpow.pop %v1765
        %v1767 = vmul.f32 %v1658, 1.442695
        %v1768 = vpow.pop %v1767
        %v1769 = vmul.f32 %v1659, 1.442695
        %v1770 = vpow.pop %v1769
        %v1771 = vmul.f32 %v1660, 1.442695
        %v1772 = vpow.pop %v1771
        %v1773 = vmul.f32 %v1661, 1.442695
        %v1774 = vpow.pop %v1773
        %v1775 = vmul.f32 %v1662, 1.442695
        %v1776 = vpow.pop %v1775
        %v1777 = vmul.f32 %v1663, 1.442695
        %v1778 = vpow.pop %v1777
        %v1779 = vmul.f32 %v1664, 1.442695
        %v1780 = vpow.pop %v1779
        %v1781 = vmul.f32 %v1665, 1.442695
        %v1782 = vpow.pop %v1781
        %v1783 = vmul.f32 %v1666, 1.442695
        %v1784 = vpow.pop %v1783
        %v1785 = vmul.f32 %v1667, 1.442695
        %v1786 = vpow.pop %v1785
        %v1787 = vmul.f32 %v1668, 1.442695
        %v1788 = vpow.pop %v1787
        %v1789 = vmul.f32 %v1669, 1.442695
        %v1790 = vpow.pop %v1789
        %v1791 = vmul.f32 %v1670, 1.442695
        %v1792 = vpow.pop %v1791
        %v1793 = vmul.f32 %v1671, 1.442695
        %v1794 = vpow.pop %v1793
        %v1795 = vmul.f32 %v1672, 1.442695
        %v1796 = vpow.pop %v1795
        %v1797 = vmul.f32 %v1673, 1.442695
        %v1798 = vpow.pop %v1797
        %v1799 = vmul.f32 %v1674, 1.442695
        %v1800 = vpow.pop %v1799
        %v1801 = vmul.f32 %v1675, 1.442695
        %v1802 = vpow.pop %v1801
        %v1803 = vmul.f32 %v1676, 1.442695
        %v1804 = vpow.pop %v1803
        %v1805 = vadd.f32 %v1678, %v1680
        %1806 = vadd.xlane.f32.xlu0 %v1805
        %v1807 = vpop.xlane.xlu0 %1806
        %v1808 = vadd.f32 %v1682, %v1684
        %1809 = vadd.xlane.f32.xlu0 %v1808
        %v1810 = vpop.xlane.xlu0 %1809
        %v1811 = vadd.f32 %v1686, %v1688
        %1812 = vadd.xlane.f32.xlu0 %v1811
        %v1813 = vpop.xlane.xlu0 %1812
        %v1814 = vadd.f32 %v1690, %v1692
        %1815 = vadd.xlane.f32.xlu0 %v1814
        %v1816 = vpop.xlane.xlu0 %1815
        %v1817 = vadd.f32 %v1694, %v1696
        %1818 = vadd.xlane.f32.xlu0 %v1817
        %v1819 = vpop.xlane.xlu0 %1818
        %v1820 = vadd.f32 %v1698, %v1700
        %1821 = vadd.xlane.f32.xlu0 %v1820
        %v1822 = vpop.xlane.xlu0 %1821
        %v1823 = vadd.f32 %v1702, %v1704
        %1824 = vadd.xlane.f32.xlu0 %v1823
        %v1825 = vpop.xlane.xlu0 %1824
        %v1826 = vadd.f32 %v1706, %v1708
        %1827 = vadd.xlane.f32.xlu0 %v1826
        %v1828 = vpop.xlane.xlu0 %1827
        %v1829 = vadd.f32 %v1710, %v1712
        %1830 = vadd.xlane.f32.xlu0 %v1829
        %v1831 = vpop.xlane.xlu0 %1830
        %v1832 = vadd.f32 %v1714, %v1716
        %1833 = vadd.xlane.f32.xlu0 %v1832
        %v1834 = vpop.xlane.xlu0 %1833
        %v1835 = vadd.f32 %v1718, %v1720
        %1836 = vadd.xlane.f32.xlu0 %v1835
        %v1837 = vpop.xlane.xlu0 %1836
        %v1838 = vadd.f32 %v1722, %v1724
        %1839 = vadd.xlane.f32.xlu0 %v1838
        %v1840 = vpop.xlane.xlu0 %1839
        %v1841 = vadd.f32 %v1726, %v1728
        %1842 = vadd.xlane.f32.xlu0 %v1841
        %v1843 = vpop.xlane.xlu0 %1842
        %v1844 = vadd.f32 %v1730, %v1732
        %1845 = vadd.xlane.f32.xlu0 %v1844
        %v1846 = vpop.xlane.xlu0 %1845
        %v1847 = vadd.f32 %v1734, %v1736
        %1848 = vadd.xlane.f32.xlu0 %v1847
        %v1849 = vpop.xlane.xlu0 %1848
        %v1850 = vadd.f32 %v1738, %v1740
        %1851 = vadd.xlane.f32.xlu0 %v1850
        %v1852 = vpop.xlane.xlu0 %1851
        %v1853 = vadd.f32 %v1742, %v1744
        %1854 = vadd.xlane.f32.xlu0 %v1853
        %v1855 = vpop.xlane.xlu0 %1854
        %v1856 = vadd.f32 %v1746, %v1748
        %1857 = vadd.xlane.f32.xlu0 %v1856
        %v1858 = vpop.xlane.xlu0 %1857
        %v1859 = vadd.f32 %v1750, %v1752
        %1860 = vadd.xlane.f32.xlu0 %v1859
        %v1861 = vpop.xlane.xlu0 %1860
        %v1862 = vadd.f32 %v1754, %v1756
        %1863 = vadd.xlane.f32.xlu0 %v1862
        %v1864 = vpop.xlane.xlu0 %1863
        %v1865 = vadd.f32 %v1758, %v1760
        %1866 = vadd.xlane.f32.xlu0 %v1865
        %v1867 = vpop.xlane.xlu0 %1866
        %v1868 = vadd.f32 %v1762, %v1764
        %1869 = vadd.xlane.f32.xlu0 %v1868
        %v1870 = vpop.xlane.xlu0 %1869
        %v1871 = vadd.f32 %v1766, %v1768
        %1872 = vadd.xlane.f32.xlu0 %v1871
        %v1873 = vpop.xlane.xlu0 %1872
        %v1874 = vadd.f32 %v1770, %v1772
        %1875 = vadd.xlane.f32.xlu0 %v1874
        %v1876 = vpop.xlane.xlu0 %1875
        %v1877 = vadd.f32 %v1774, %v1776
        %1878 = vadd.xlane.f32.xlu0 %v1877
        %v1879 = vpop.xlane.xlu0 %1878
        %v1880 = vadd.f32 %v1778, %v1780
        %1881 = vadd.xlane.f32.xlu0 %v1880
        %v1882 = vpop.xlane.xlu0 %1881
        %v1883 = vadd.f32 %v1782, %v1784
        %1884 = vadd.xlane.f32.xlu0 %v1883
        %v1885 = vpop.xlane.xlu0 %1884
        %v1886 = vadd.f32 %v1786, %v1788
        %1887 = vadd.xlane.f32.xlu0 %v1886
        %v1888 = vpop.xlane.xlu0 %1887
        %v1889 = vadd.f32 %v1790, %v1792
        %1890 = vadd.xlane.f32.xlu0 %v1889
        %v1891 = vpop.xlane.xlu0 %1890
        %v1892 = vadd.f32 %v1794, %v1796
        %1893 = vadd.xlane.f32.xlu0 %v1892
        %v1894 = vpop.xlane.xlu0 %1893
        %v1895 = vadd.f32 %v1798, %v1800
        %1896 = vadd.xlane.f32.xlu0 %v1895
        %v1897 = vpop.xlane.xlu0 %1896
        %v1898 = vadd.f32 %v1802, %v1804
        %1899 = vadd.xlane.f32.xlu0 %v1898
        %v1900 = vpop.xlane.xlu0 %1899
        %v1901 = vpack.c.bf16 %v1682, %v1678
        %v1902 = vpack.c.bf16 %v1684, %v1680
        %v1903 = vpack.c.bf16 %v1690, %v1686
        %v1904 = vpack.c.bf16 %v1692, %v1688
        %v1905 = vpack.c.bf16 %v1698, %v1694
        %v1906 = vpack.c.bf16 %v1700, %v1696
        %v1907 = vpack.c.bf16 %v1706, %v1702
        %v1908 = vpack.c.bf16 %v1708, %v1704
        %v1909 = vpack.c.bf16 %v1714, %v1710
        %v1910 = vpack.c.bf16 %v1716, %v1712
        %v1911 = vpack.c.bf16 %v1722, %v1718
        %v1912 = vpack.c.bf16 %v1724, %v1720
        %v1913 = vpack.c.bf16 %v1730, %v1726
        %v1914 = vpack.c.bf16 %v1732, %v1728
        %v1915 = vpack.c.bf16 %v1738, %v1734
        %v1916 = vpack.c.bf16 %v1740, %v1736
        %v1917 = vpack.c.bf16 %v1746, %v1742
        %v1918 = vpack.c.bf16 %v1748, %v1744
        %v1919 = vpack.c.bf16 %v1754, %v1750
        %v1920 = vpack.c.bf16 %v1756, %v1752
        %v1921 = vpack.c.bf16 %v1762, %v1758
        %v1922 = vpack.c.bf16 %v1764, %v1760
        %v1923 = vpack.c.bf16 %v1770, %v1766
        %v1924 = vpack.c.bf16 %v1772, %v1768
        %v1925 = vpack.c.bf16 %v1778, %v1774
        %v1926 = vpack.c.bf16 %v1780, %v1776
        %v1927 = vpack.c.bf16 %v1786, %v1782
        %v1928 = vpack.c.bf16 %v1788, %v1784
        %v1929 = vpack.c.bf16 %v1794, %v1790
        %v1930 = vpack.c.bf16 %v1796, %v1792
        %v1931 = vpack.c.bf16 %v1802, %v1798
        %v1932 = vpack.c.bf16 %v1804, %v1800
        %1933 = vmatprep.subr.bf16.mxu0 0
        %1934 = vmatpush1.bf16.msra.mxu0 %v999
        %1935 = vmatprep.subr.bf16.mxu0 0
        %1936 = vmatpush1.bf16.msra.mxu0 %v1000
        %1937 = vmatprep.subr.bf16.mxu0 0
        %1938 = vmatpush1.bf16.msra.mxu0 %v1001
        %1939 = vmatprep.subr.bf16.mxu0 0
        %1940 = vmatpush1.bf16.msra.mxu0 %v1002
        %1941 = vmatprep.subr.bf16.mxu0 0
        %1942 = vmatpush1.bf16.msra.mxu0 %v1003
        %1943 = vmatprep.subr.bf16.mxu0 0
        %1944 = vmatpush1.bf16.msra.mxu0 %v1004
        %1945 = vmatprep.subr.bf16.mxu0 0
        %1946 = vmatpush1.bf16.msra.mxu0 %v1005
        %1947 = vmatprep.subr.bf16.mxu0 0
        %1948 = vmatpush1.bf16.msra.mxu0 %v1006
        %1949 = vmatprep.subr.bf16.mxu0 0
        %1950 = vmatpush1.bf16.msra.mxu0 %v1007
        %1951 = vmatprep.subr.bf16.mxu0 0
        %1952 = vmatpush1.bf16.msra.mxu0 %v1008
        %1953 = vmatprep.subr.bf16.mxu0 0
        %1954 = vmatpush1.bf16.msra.mxu0 %v1009
        %1955 = vmatprep.subr.bf16.mxu0 0
        %1956 = vmatpush1.bf16.msra.mxu0 %v1010
        %1957 = vmatprep.subr.bf16.mxu0 0
        %1958 = vmatpush1.bf16.msra.mxu0 %v1011
        %1959 = vmatprep.subr.bf16.mxu0 0
        %1960 = vmatpush1.bf16.msra.mxu0 %v1012
        %1961 = vmatprep.subr.bf16.mxu0 0
        %1962 = vmatpush1.bf16.msra.mxu0 %v1013
        %1963 = vmatprep.subr.bf16.mxu0 0
        %1964 = vmatpush1.bf16.msra.mxu0 %v1014
        %1965 = vmatprep.mubr.bf16.mxu0 %v1902
        %1966 = vmatmul.mubr.bf16.gmra.mrb[0].mxu0 %v1901
        %v1967 = vpop.f32.mrb[0].mxu0
        %v1968 = vadd.f32 0.0, %v1967
        %v1969 = vpop.f32.mrb[0].mxu0
        %v1970 = vpop.f32.mrb[0].mxu0
        %v1971 = vadd.f32 0.0, %v1970
        %v1972 = vpop.f32.mrb[0].mxu0
        %1973 = vmatprep.mubr.bf16.mxu0 %v1904
        %1974 = vmatmul.mubr.bf16.gmra.mrb[0].mxu0 %v1903
        %v1975 = vpop.f32.mrb[0].mxu0
        %v1976 = vadd.f32 0.0, %v1975
        %v1977 = vpop.f32.mrb[0].mxu0
        %v1978 = vpop.f32.mrb[0].mxu0
        %v1979 = vadd.f32 0.0, %v1978
        %v1980 = vpop.f32.mrb[0].mxu0
        %1981 = vmatprep.mubr.bf16.mxu0 %v1906
        %1982 = vmatmul.mubr.bf16.gmra.mrb[0].mxu0 %v1905
        %v1983 = vpop.f32.mrb[0].mxu0
        %v1984 = vadd.f32 0.0, %v1983
        %v1985 = vpop.f32.mrb[0].mxu0
        %v1986 = vpop.f32.mrb[0].mxu0
        %v1987 = vadd.f32 0.0, %v1986
        %v1988 = vpop.f32.mrb[0].mxu0
        %1989 = vmatprep.mubr.bf16.mxu0 %v1908
        %1990 = vmatmul.mubr.bf16.gmra.mrb[0].mxu0 %v1907
        %v1991 = vpop.f32.mrb[0].mxu0
        %v1992 = vadd.f32 0.0, %v1991
        %v1993 = vpop.f32.mrb[0].mxu0
        %v1994 = vpop.f32.mrb[0].mxu0
        %v1995 = vadd.f32 0.0, %v1994
        %v1996 = vpop.f32.mrb[0].mxu0
        %1997 = vmatprep.mubr.bf16.mxu0 %v1910
        %1998 = vmatmul.mubr.bf16.gmra.mrb[0].mxu0 %v1909
        %v1999 = vpop.f32.mrb[0].mxu0
        %v2000 = vadd.f32 0.0, %v1999
        %v2001 = vpop.f32.mrb[0].mxu0
        %v2002 = vpop.f32.mrb[0].mxu0
        %v2003 = vadd.f32 0.0, %v2002
        %v2004 = vpop.f32.mrb[0].mxu0
        %2005 = vmatprep.mubr.bf16.mxu0 %v1912
        %2006 = vmatmul.mubr.bf16.gmra.mrb[0].mxu0 %v1911
        %v2007 = vpop.f32.mrb[0].mxu0
        %v2008 = vadd.f32 0.0, %v2007
        %v2009 = vpop.f32.mrb[0].mxu0
        %v2010 = vpop.f32.mrb[0].mxu0
        %v2011 = vadd.f32 0.0, %v2010
        %v2012 = vpop.f32.mrb[0].mxu0
        %2013 = vmatprep.mubr.bf16.mxu0 %v1914
        %2014 = vmatmul.mubr.bf16.gmra.mrb[0].mxu0 %v1913
        %v2015 = vpop.f32.mrb[0].mxu0
        %v2016 = vadd.f32 0.0, %v2015
        %v2017 = vpop.f32.mrb[0].mxu0
        %v2018 = vpop.f32.mrb[0].mxu0
        %v2019 = vadd.f32 0.0, %v2018
        %v2020 = vpop.f32.mrb[0].mxu0
        %2021 = vmatprep.mubr.bf16.mxu0 %v1916
        %2022 = vmatmul.mubr.bf16.gmra.mrb[0].mxu0 %v1915
        %v2023 = vpop.f32.mrb[0].mxu0
        %v2024 = vadd.f32 0.0, %v2023
        %v2025 = vpop.f32.mrb[0].mxu0
        %v2026 = vpop.f32.mrb[0].mxu0
        %v2027 = vadd.f32 0.0, %v2026
        %v2028 = vpop.f32.mrb[0].mxu0
        %2029 = vmatprep.mubr.bf16.mxu0 %v1918
        %2030 = vmatmul.mubr.bf16.gmra.mrb[0].mxu0 %v1917
        %v2031 = vpop.f32.mrb[0].mxu0
        %v2032 = vadd.f32 0.0, %v2031
        %v2033 = vpop.f32.mrb[0].mxu0
        %v2034 = vpop.f32.mrb[0].mxu0
        %v2035 = vadd.f32 0.0, %v2034
        %v2036 = vpop.f32.mrb[0].mxu0
        %2037 = vmatprep.mubr.bf16.mxu0 %v1920
        %2038 = vmatmul.mubr.bf16.gmra.mrb[0].mxu0 %v1919
        %v2039 = vpop.f32.mrb[0].mxu0
        %v2040 = vadd.f32 0.0, %v2039
        %v2041 = vpop.f32.mrb[0].mxu0
        %v2042 = vpop.f32.mrb[0].mxu0
        %v2043 = vadd.f32 0.0, %v2042
        %v2044 = vpop.f32.mrb[0].mxu0
        %2045 = vmatprep.mubr.bf16.mxu0 %v1922
        %2046 = vmatmul.mubr.bf16.gmra.mrb[0].mxu0 %v1921
        %v2047 = vpop.f32.mrb[0].mxu0
        %v2048 = vadd.f32 0.0, %v2047
        %v2049 = vpop.f32.mrb[0].mxu0
        %v2050 = vpop.f32.mrb[0].mxu0
        %v2051 = vadd.f32 0.0, %v2050
        %v2052 = vpop.f32.mrb[0].mxu0
        %2053 = vmatprep.mubr.bf16.mxu0 %v1924
        %2054 = vmatmul.mubr.bf16.gmra.mrb[0].mxu0 %v1923
        %v2055 = vpop.f32.mrb[0].mxu0
        %v2056 = vadd.f32 0.0, %v2055
        %v2057 = vpop.f32.mrb[0].mxu0
        %v2058 = vpop.f32.mrb[0].mxu0
        %v2059 = vadd.f32 0.0, %v2058
        %v2060 = vpop.f32.mrb[0].mxu0
        %2061 = vmatprep.mubr.bf16.mxu0 %v1926
        %2062 = vmatmul.mubr.bf16.gmra.mrb[0].mxu0 %v1925
        %v2063 = vpop.f32.mrb[0].mxu0
        %v2064 = vadd.f32 0.0, %v2063
        %v2065 = vpop.f32.mrb[0].mxu0
        %v2066 = vpop.f32.mrb[0].mxu0
        %v2067 = vadd.f32 0.0, %v2066
        %v2068 = vpop.f32.mrb[0].mxu0
        %2069 = vmatprep.mubr.bf16.mxu0 %v1928
        %2070 = vmatmul.mubr.bf16.gmra.mrb[0].mxu0 %v1927
        %v2071 = vpop.f32.mrb[0].mxu0
        %v2072 = vadd.f32 0.0, %v2071
        %v2073 = vpop.f32.mrb[0].mxu0
        %v2074 = vpop.f32.mrb[0].mxu0
        %v2075 = vadd.f32 0.0, %v2074
        %v2076 = vpop.f32.mrb[0].mxu0
        %2077 = vmatprep.mubr.bf16.mxu0 %v1930
        %2078 = vmatmul.mubr.bf16.gmra.mrb[0].mxu0 %v1929
        %v2079 = vpop.f32.mrb[0].mxu0
        %v2080 = vadd.f32 0.0, %v2079
        %v2081 = vpop.f32.mrb[0].mxu0
        %v2082 = vpop.f32.mrb[0].mxu0
        %v2083 = vadd.f32 0.0, %v2082
        %v2084 = vpop.f32.mrb[0].mxu0
        %2085 = vmatprep.mubr.bf16.mxu0 %v1932
        %2086 = vmatmul.mubr.bf16.gmra.mrb[0].mxu0 %v1931
        %v2087 = vpop.f32.mrb[0].mxu0
        %v2088 = vadd.f32 0.0, %v2087
        %v2089 = vpop.f32.mrb[0].mxu0
        %v2090 = vpop.f32.mrb[0].mxu0
        %v2091 = vadd.f32 0.0, %v2090
        %v2092 = vpop.f32.mrb[0].mxu0
        %2093 = vdwg.mxu0
        %v2094 = vrcp.pop %v1807
        %v2095 = vrcp.pop %v1810
        %v2096 = vrcp.pop %v1813
        %v2097 = vrcp.pop %v1816
        %v2098 = vrcp.pop %v1819
        %v2099 = vrcp.pop %v1822
        %v2100 = vrcp.pop %v1825
        %v2101 = vrcp.pop %v1828
        %v2102 = vrcp.pop %v1831
        %v2103 = vrcp.pop %v1834
        %v2104 = vrcp.pop %v1837
        %v2105 = vrcp.pop %v1840
        %v2106 = vrcp.pop %v1843
        %v2107 = vrcp.pop %v1846
        %v2108 = vrcp.pop %v1849
        %v2109 = vrcp.pop %v1852
        %v2110 = vrcp.pop %v1855
        %v2111 = vrcp.pop %v1858
        %v2112 = vrcp.pop %v1861
        %v2113 = vrcp.pop %v1864
        %v2114 = vrcp.pop %v1867
        %v2115 = vrcp.pop %v1870
        %v2116 = vrcp.pop %v1873
        %v2117 = vrcp.pop %v1876
        %v2118 = vrcp.pop %v1879
        %v2119 = vrcp.pop %v1882
        %v2120 = vrcp.pop %v1885
        %v2121 = vrcp.pop %v1888
        %v2122 = vrcp.pop %v1891
        %v2123 = vrcp.pop %v1894
        %v2124 = vrcp.pop %v1897
        %v2125 = vrcp.pop %v1900
        %v2126 = vmul.f32 %v1968, %v2094
        %v2127 = vmul.f32 %v1971, %v2095
        %v2128 = vmul.f32 %v1976, %v2096
        %v2129 = vmul.f32 %v1979, %v2097
        %v2130 = vmul.f32 %v1984, %v2098
        %v2131 = vmul.f32 %v1987, %v2099
        %v2132 = vmul.f32 %v1992, %v2100
        %v2133 = vmul.f32 %v1995, %v2101
        %v2134 = vmul.f32 %v2000, %v2102
        %v2135 = vmul.f32 %v2003, %v2103
        %v2136 = vmul.f32 %v2008, %v2104
        %v2137 = vmul.f32 %v2011, %v2105
        %v2138 = vmul.f32 %v2016, %v2106
        %v2139 = vmul.f32 %v2019, %v2107
        %v2140 = vmul.f32 %v2024, %v2108
        %v2141 = vmul.f32 %v2027, %v2109
        %v2142 = vmul.f32 %v2032, %v2110
        %v2143 = vmul.f32 %v2035, %v2111
        %v2144 = vmul.f32 %v2040, %v2112
        %v2145 = vmul.f32 %v2043, %v2113
        %v2146 = vmul.f32 %v2048, %v2114
        %v2147 = vmul.f32 %v2051, %v2115
        %v2148 = vmul.f32 %v2056, %v2116
        %v2149 = vmul.f32 %v2059, %v2117
        %v2150 = vmul.f32 %v2064, %v2118
        %v2151 = vmul.f32 %v2067, %v2119
        %v2152 = vmul.f32 %v2072, %v2120
        %v2153 = vmul.f32 %v2075, %v2121
        %v2154 = vmul.f32 %v2080, %v2122
        %v2155 = vmul.f32 %v2083, %v2123
        %v2156 = vmul.f32 %v2088, %v2124
        %v2157 = vmul.f32 %v2091, %v2125
        %2158 = vst.msk [vmem:[%s163] sm:$0xff] %vm1063, %v2126
        %2159 = vst.msk [vmem:[%s163 + $0x8] sm:$0xff] %vm1063, %v2127
        %2160 = vst.msk [vmem:[%s163 + $0x10] sm:$0xff] %vm1063, %v2128
        %2161 = vst.msk [vmem:[%s163 + $0x18] sm:$0xff] %vm1063, %v2129
        %2162 = vst.msk [vmem:[%s163 + $0x20] sm:$0xff] %vm1063, %v2130
        %2163 = vst.msk [vmem:[%s163 + $0x28] sm:$0xff] %vm1063, %v2131
        %2164 = vst.msk [vmem:[%s163 + $0x30] sm:$0xff] %vm1063, %v2132
        %2165 = vst.msk [vmem:[%s163 + $0x38] sm:$0xff] %vm1063, %v2133
        %2166 = vst.msk [vmem:[%s163 + $0x40] sm:$0xff] %vm1063, %v2134
        %2167 = vst.msk [vmem:[%s163 + $0x48] sm:$0xff] %vm1063, %v2135
        %2168 = vst.msk [vmem:[%s163 + $0x50] sm:$0xff] %vm1063, %v2136
        %2169 = vst.msk [vmem:[%s163 + $0x58] sm:$0xff] %vm1063, %v2137
        %2170 = vst.msk [vmem:[%s163 + $0x60] sm:$0xff] %vm1063, %v2138
        %2171 = vst.msk [vmem:[%s163 + $0x68] sm:$0xff] %vm1063, %v2139
        %2172 = vst.msk [vmem:[%s163 + $0x70] sm:$0xff] %vm1063, %v2140
        %2173 = vst.msk [vmem:[%s163 + $0x78] sm:$0xff] %vm1063, %v2141
        %2174 = vst.msk [vmem:[%s163 + $0x80] sm:$0xff] %vm1063, %v2142
        %2175 = vst.msk [vmem:[%s163 + $0x88] sm:$0xff] %vm1063, %v2143
        %2176 = vst.msk [vmem:[%s163 + $0x90] sm:$0xff] %vm1063, %v2144
        %2177 = vst.msk [vmem:[%s163 + $0x98] sm:$0xff] %vm1063, %v2145
        %2178 = vst.msk [vmem:[%s163 + $0xa0] sm:$0xff] %vm1063, %v2146
        %2179 = vst.msk [vmem:[%s163 + $0xa8] sm:$0xff] %vm1063, %v2147
        %2180 = vst.msk [vmem:[%s163 + $0xb0] sm:$0xff] %vm1063, %v2148
        %2181 = vst.msk [vmem:[%s163 + $0xb8] sm:$0xff] %vm1063, %v2149
        %2182 = vst.msk [vmem:[%s163 + $0xc0] sm:$0xff] %vm1063, %v2150
        %2183 = vst.msk [vmem:[%s163 + $0xc8] sm:$0xff] %vm1063, %v2151
        %2184 = vst.msk [vmem:[%s163 + $0xd0] sm:$0xff] %vm1063, %v2152
        %2185 = vst.msk [vmem:[%s163 + $0xd8] sm:$0xff] %vm1063, %v2153
        %2186 = vst.msk [vmem:[%s163 + $0xe0] sm:$0xff] %vm1063, %v2154
        %2187 = vst.msk [vmem:[%s163 + $0xe8] sm:$0xff] %vm1063, %v2155
        %2188 = vst.msk [vmem:[%s163 + $0xf0] sm:$0xff] %vm1063, %v2156
        %2189 = vst.msk [vmem:[%s163 + $0xf8] sm:$0xff] %vm1063, %v2157
        %p2190 = scmp.lt.s32.totalorder %s16, 1
        %s2191 = scalar_select %p2190, %s16, 1
        %s2192 = smul.addr %s2191, 32
        %s2193 = smul.addr %s2192, 8
        %s2194 = scalar_lea.vmem %s2, %s2193
        // Predicated region
        $region33: #{head_forward.1} parent=27 // pred_check
          %p2195 = pneg %p81
        $region34: #{head_forward.1} parent=27 // pred_check_branch
          %2197 = sbr.rel (%p2195) target = $region36
        $region35: #{head_forward.1} parent=27 // pred_region
          _
        $region36: #{head_forward.1} parent=27 // pred_fallthru
          _
      $region28: #{head_forward.1} parent=5 // pred_fallthru
        _
      %p2198 = scmp.le.s32.totalorder 2, %s11
      // Predicated region
      $region37: #{head_forward.1} parent=5 // pred_check
        %p2199 = pneg %p2198
      $region38: #{head_forward.1} parent=5 // pred_check_branch
        %2201 = sbr.rel (%p2199) target = $region40
      $region39: #{head_forward.1} parent=5 // pred_region
        %s2202 = ssub.s32 %s11, 2
        // Predicated region
        $region41: #{head_forward.1} parent=39 // pred_check
          %p2203 = pneg %p87
        $region42: #{head_forward.1} parent=39 // pred_check_branch
          %2205 = sbr.rel (%p2203) target = $region44
        $region43: #{head_forward.1} parent=39 // pred_region
          %p2206 = scmp.lt.s32.totalorder %s17, 1
          %s2207 = scalar_select %p2206, %s17, 1
          %s2208 = smul.addr %s2207, 32
          %s2209 = smul.addr %s2208, 8
          %s2210 = scalar_lea.vmem %s2, %s2209
        $region44: #{head_forward.1} parent=39 // pred_fallthru
          _
      $region40: #{head_forward.1} parent=5 // pred_fallthru
        _
    $region6: #{head_forward.1} parent=1 // loop_footer
      %s15 = sadd.s32 1, %s11
    $region7: #{head_forward.1} parent=1 // loop_footer_branch
      %10 = sbr.rel target = $region3
    $region8: #{head_forward.1} parent=1 // loop_exit
      _
    %2211 = vsyncpa [#allocation3], 1
    %s2212 = scalar_lea.sflag [#allocation3], 1
    %2213 = vsyncpa %s2212, 1

</llo_original>
